<compile_context>
chip_gen: v6e
topology: v6e:2x2x1
jax: 0.10.0
libtpu: 0.0.40
codegen_flags: <defaults>
</compile_context>

<pallas_src>
import functools

import jax
import jax.numpy as jnp
import numpy as np
from jax.experimental import pallas as pl
from jax.experimental.pallas import tpu as pltpu

# ---------------- config (small, consistent with Qwen2 structure) -----------
B, S, H = 2, 8, 32              # batch, seq, hidden_size
NUM_HEADS = 4                   # num_attention_heads
NUM_KV_HEADS = 2                # num_key_value_heads
HEAD_DIM = H // NUM_HEADS       # 8
INTERMEDIATE = 64               # intermediate_size
RMS_EPS = 1e-6
ROPE_THETA = 10000.0
SCALING = HEAD_DIM ** -0.5
N_REP = NUM_HEADS // NUM_KV_HEADS
Q_DIM = NUM_HEADS * HEAD_DIM        # 32
KV_DIM = NUM_KV_HEADS * HEAD_DIM    # 16
QKV_DIM = Q_DIM + 2 * KV_DIM        # 64


# ---------------------------- fused layer kernel ----------------------------
def decoder_layer_kernel(x_ref, ln1_ref, wqkv_ref, bqkv_ref, rot_ref,
                         cos_ref, sin_ref, wo_ref, ln2_ref, wgu_ref, wd_ref,
                         o_ref, *, eps, scaling, num_heads, num_kv_heads,
                         head_dim, intermediate):
    # One grid step == one batch element: x_ref is (S, H).
    x = x_ref[...].astype(jnp.float32)                      # residual 1

    # ---- input RMSNorm ----
    var = jnp.mean(x * x, axis=-1, keepdims=True)
    hs = x * jax.lax.rsqrt(var + eps) * ln1_ref[...]

    # ---- fused QKV projection (one MXU op) ----
    qkv = jnp.dot(hs, wqkv_ref[...],
                  preferred_element_type=jnp.float32) + bqkv_ref[...]
    q_dim = num_heads * head_dim
    kv_dim = num_kv_heads * head_dim
    q = qkv[:, :q_dim]                                      # (S, Hq*D)
    k = qkv[:, q_dim:q_dim + kv_dim]                        # (S, Hkv*D)
    v = qkv[:, q_dim + kv_dim:q_dim + 2 * kv_dim]           # (S, Hkv*D)

    # ---- RoPE on all heads at once ----
    # rotate_half(x) per head == x @ rot (block-diagonal permutation/sign mat)
    cos_q = cos_ref[...]                                    # (S, Hq*D)
    sin_q = sin_ref[...]
    rot_q = rot_ref[...]                                    # (Hq*D, Hq*D)
    cos_k = cos_q[:, :kv_dim]
    sin_k = sin_q[:, :kv_dim]
    rot_k = rot_q[:kv_dim, :kv_dim]
    q = q * cos_q + jnp.dot(q, rot_q,
                            preferred_element_type=jnp.float32) * sin_q
    k = k * cos_k + jnp.dot(k, rot_k,
                            preferred_element_type=jnp.float32) * sin_k

    # ---- causal mask (built once per kernel invocation) ----
    seq = x.shape[0]
    row = jax.lax.broadcasted_iota(jnp.int32, (seq, seq), 0)
    col = jax.lax.broadcasted_iota(jnp.int32, (seq, seq), 1)
    causal = col <= row

    # ---- attention over all query heads (static unroll, GQA share of KV) ---
    n_rep = num_heads // num_kv_heads
    wo = wo_ref[...]                                        # (Hq*D, H)
    attn_o = jnp.zeros((seq, x.shape[1]), jnp.float32)
    for h in range(num_heads):
        kvh = h // n_rep                                    # repeat_kv sharing
        qh = q[:, h * head_dim:(h + 1) * head_dim]          # (S, D)
        kh = k[:, kvh * head_dim:(kvh + 1) * head_dim]      # (S, D)
        vh = v[:, kvh * head_dim:(kvh + 1) * head_dim]      # (S, D)
        sc = jax.lax.dot_general(qh, kh, (((1,), (1,)), ((), ())),
                                 preferred_element_type=jnp.float32) * scaling
        sc = jnp.where(causal, sc, -1e30)
        sc = sc - jnp.max(sc, axis=-1, keepdims=True)
        p = jnp.exp(sc)
        p = p * pl.reciprocal(jnp.sum(p, axis=-1, keepdims=True), approx=True)
        oh = jnp.dot(p, vh, preferred_element_type=jnp.float32)   # (S, D)
        # fold this head's slice of the O-projection directly into the accum
        attn_o = attn_o + jnp.dot(oh,
                                  wo[h * head_dim:(h + 1) * head_dim, :],
                                  preferred_element_type=jnp.float32)

    h1 = x + attn_o                                         # residual add 1

    # ---- post-attention RMSNorm ----
    var2 = jnp.mean(h1 * h1, axis=-1, keepdims=True)
    hs2 = h1 * jax.lax.rsqrt(var2 + eps) * ln2_ref[...]

    # ---- fused SwiGLU MLP (gate & up in one lane-dense (H, 2I) matmul) ----
    gu = jnp.dot(hs2, wgu_ref[...], preferred_element_type=jnp.float32)
    g = gu[:, :intermediate]
    u = gu[:, intermediate:]
    act = g * jax.nn.sigmoid(g) * u
    mlp_o = jnp.dot(act, wd_ref[...], preferred_element_type=jnp.float32)

    o_ref[...] = (h1 + mlp_o).astype(o_ref.dtype)           # residual add 2


# ------------------------- host-side weight folding --------------------------
def prepare_params(params, cos, sin):
    """Fold weights into fused layouts once (load-time in a real model)."""
    wqkv = jnp.concatenate([params["q_w"], params["k_w"], params["v_w"]],
                           axis=1)                           # (H, 64)
    bqkv = jnp.concatenate([params["q_b"], params["k_b"],
                            params["v_b"]]).reshape(1, QKV_DIM)
    wgu = jnp.concatenate([params["gate_w"], params["up_w"]], axis=1)  # (H,128)

    # block-diagonal rotate_half matrix for the flattened head layout
    half = HEAD_DIM // 2
    blk = np.zeros((HEAD_DIM, HEAD_DIM), np.float32)
    for i in range(half):
        blk[i + half, i] = -1.0       # out[:, i]      = -x[:, i+half]
        blk[i, i + half] = 1.0        # out[:, i+half] =  x[:, i]
    rot = jnp.asarray(np.kron(np.eye(NUM_HEADS, dtype=np.float32), blk))

    # cos/sin tiled to the flat (S, num_heads*head_dim) layout
    cos_q = jnp.tile(cos, (1, NUM_HEADS))
    sin_q = jnp.tile(sin, (1, NUM_HEADS))

    return dict(
        ln1=params["input_ln_w"].reshape(1, H),
        ln2=params["post_ln_w"].reshape(1, H),
        wqkv=wqkv, bqkv=bqkv, rot=rot, cos_q=cos_q, sin_q=sin_q,
        wo=params["o_w"], wgu=wgu, wd=params["down_w"])


# ------------------------------ layer wrapper --------------------------------
def qwen2_decoder_layer(prep, hidden_states):
    Bn, Sn, Hn = hidden_states.shape
    x2d = hidden_states.reshape(Bn * Sn, Hn)

    kernel = functools.partial(
        decoder_layer_kernel, eps=RMS_EPS, scaling=SCALING,
        num_heads=NUM_HEADS, num_kv_heads=NUM_KV_HEADS, head_dim=HEAD_DIM,
        intermediate=INTERMEDIATE)

    full = lambda b: (0, 0)   # weights: same block every step -> DMA'd once

    out = pl.pallas_call(
        kernel,
        out_shape=jax.ShapeDtypeStruct((Bn * Sn, Hn), hidden_states.dtype),
        grid=(Bn,),
        in_specs=[
            pl.BlockSpec((Sn, Hn), lambda b: (b, 0)),          # x  (per batch)
            pl.BlockSpec((1, Hn), full),                       # ln1 weight
            pl.BlockSpec((Hn, QKV_DIM), full),                 # fused Wqkv
            pl.BlockSpec((1, QKV_DIM), full),                  # fused bias
            pl.BlockSpec((Q_DIM, Q_DIM), full),                # rotate_half mat
            pl.BlockSpec((Sn, Q_DIM), full),                   # cos (tiled)
            pl.BlockSpec((Sn, Q_DIM), full),                   # sin (tiled)
            pl.BlockSpec((Q_DIM, Hn), full),                   # Wo
            pl.BlockSpec((1, Hn), full),                       # ln2 weight
            pl.BlockSpec((Hn, 2 * INTERMEDIATE), full),        # fused Wgate|Wup
            pl.BlockSpec((INTERMEDIATE, Hn), full),            # Wdown
        ],
        out_specs=pl.BlockSpec((Sn, Hn), lambda b: (b, 0)),
        compiler_params=pltpu.CompilerParams(
            dimension_semantics=("parallel",)),                # v7x: 1 TC / batch
    )(x2d, prep["ln1"], prep["wqkv"], prep["bqkv"], prep["rot"],
      prep["cos_q"], prep["sin_q"], prep["wo"], prep["ln2"], prep["wgu"],
      prep["wd"])

    return out.reshape(Bn, Sn, Hn)


# ------------------------- pure numpy reference ------------------------------
def reference(params, x, cos, sin):
    p = {k: np.asarray(v, np.float64) for k, v in params.items()}
    x = np.asarray(x, np.float64)
    cos = np.asarray(cos, np.float64)
    sin = np.asarray(sin, np.float64)

    def rms(h, w):
        var = np.mean(h * h, axis=-1, keepdims=True)
        return w * (h / np.sqrt(var + RMS_EPS))

    def rotate_half(t):
        half = t.shape[-1] // 2
        return np.concatenate([-t[..., half:], t[..., :half]], axis=-1)

    Bn, Sn, _ = x.shape
    residual = x
    h = rms(x, p["input_ln_w"])
    q = h @ p["q_w"] + p["q_b"]
    k = h @ p["k_w"] + p["k_b"]
    v = h @ p["v_w"] + p["v_b"]
    q = q.reshape(Bn, Sn, NUM_HEADS, HEAD_DIM).transpose(0, 2, 1, 3)
    k = k.reshape(Bn, Sn, NUM_KV_HEADS, HEAD_DIM).transpose(0, 2, 1, 3)
    v = v.reshape(Bn, Sn, NUM_KV_HEADS, HEAD_DIM).transpose(0, 2, 1, 3)
    c = cos[None, None]
    s = sin[None, None]
    q = q * c + rotate_half(q) * s
    k = k * c + rotate_half(k) * s
    k = np.repeat(k, N_REP, axis=1)
    v = np.repeat(v, N_REP, axis=1)
    scores = (q @ k.transpose(0, 1, 3, 2)) * SCALING
    upper = np.triu(np.ones((Sn, Sn), bool), 1)
    scores = np.where(upper[None, None], -1e30, scores)
    scores = scores - scores.max(-1, keepdims=True)
    pw = np.exp(scores)
    pw = pw / pw.sum(-1, keepdims=True)
    attn = pw @ v
    attn = attn.transpose(0, 2, 1, 3).reshape(Bn, Sn, NUM_HEADS * HEAD_DIM)
    attn = attn @ p["o_w"]
    h = residual + attn
    residual = h
    h2 = rms(h, p["post_ln_w"])
    g = h2 @ p["gate_w"]
    u = h2 @ p["up_w"]
    mlp_ref = (g / (1.0 + np.exp(-g)) * u) @ p["down_w"]
    return residual + mlp_ref


# --------------------------------- main ---------------------------------------
if __name__ == "__main__":
    key = jax.random.PRNGKey(0)
    ks = jax.random.split(key, 12)
    scale = 0.02

    params = {
        "input_ln_w": 1.0 + 0.1 * jax.random.normal(ks[0], (H,), jnp.float32),
        "post_ln_w":  1.0 + 0.1 * jax.random.normal(ks[1], (H,), jnp.float32),
        # projection weights stored as (in_features, out_features)
        "q_w": scale * jax.random.normal(ks[2], (H, Q_DIM), jnp.float32),
        "q_b": scale * jax.random.normal(ks[3], (Q_DIM,), jnp.float32),
        "k_w": scale * jax.random.normal(ks[4], (H, KV_DIM), jnp.float32),
        "k_b": scale * jax.random.normal(ks[5], (KV_DIM,), jnp.float32),
        "v_w": scale * jax.random.normal(ks[6], (H, KV_DIM), jnp.float32),
        "v_b": scale * jax.random.normal(ks[7], (KV_DIM,), jnp.float32),
        "o_w": scale * jax.random.normal(ks[8], (Q_DIM, H), jnp.float32),
        "gate_w": scale * jax.random.normal(ks[9], (H, INTERMEDIATE), jnp.float32),
        "up_w":   scale * jax.random.normal(ks[10], (H, INTERMEDIATE), jnp.float32),
        "down_w": scale * jax.random.normal(ks[11], (INTERMEDIATE, H), jnp.float32),
    }

    # rotary position embeddings (cos, sin) of shape (S, head_dim)
    inv_freq = 1.0 / (ROPE_THETA ** (np.arange(0, HEAD_DIM, 2, dtype=np.float64)
                                     / HEAD_DIM))
    pos = np.arange(S, dtype=np.float64)
    freqs = np.outer(pos, inv_freq)                       # (S, D/2)
    emb = np.concatenate([freqs, freqs], axis=-1)         # (S, D)
    cos = jnp.asarray(np.cos(emb), jnp.float32)
    sin = jnp.asarray(np.sin(emb), jnp.float32)

    hidden_states = jax.random.normal(jax.random.PRNGKey(42), (B, S, H),
                                      jnp.float32)

    prep = prepare_params(params, cos, sin)
    out = qwen2_decoder_layer(prep, hidden_states)
    out = jax.block_until_ready(out)

    ref = reference(params, hidden_states, cos, sin)
    np.testing.assert_allclose(np.asarray(out), ref, rtol=2e-2, atol=2e-3)

    print("KERNEL_OK")
</pallas_src>

<mosaic_0001>
module attributes {stable_mosaic.version = 11 : i64} {
  func.func @decoder_layer_kernel(%arg0: i32, %arg1: memref<8x32xf32, #tpu.memory_space<vmem>>, %arg2: memref<1x32xf32, #tpu.memory_space<vmem>>, %arg3: memref<32x64xf32, #tpu.memory_space<vmem>>, %arg4: memref<1x64xf32, #tpu.memory_space<vmem>>, %arg5: memref<32x32xf32, #tpu.memory_space<vmem>>, %arg6: memref<8x32xf32, #tpu.memory_space<vmem>>, %arg7: memref<8x32xf32, #tpu.memory_space<vmem>>, %arg8: memref<32x32xf32, #tpu.memory_space<vmem>>, %arg9: memref<1x32xf32, #tpu.memory_space<vmem>>, %arg10: memref<32x128xf32, #tpu.memory_space<vmem>>, %arg11: memref<64x32xf32, #tpu.memory_space<vmem>>, %arg12: memref<8x32xf32, #tpu.memory_space<vmem>>) attributes {dimension_semantics = [#tpu.dimension_semantics<parallel>], iteration_bounds = array<i64: 2>, scalar_prefetch = 0 : i64, scratch_operands = 0 : i64, tpu.core_type = #tpu.core_type<tc>, window_params = [{transform_indices = @transform_0, window_bounds = array<i64: 8, 32>}, {pipeline_mode = #tpu.pipeline_mode<synchronous>, transform_indices = @transform_1, window_bounds = array<i64: 1, 32>}, {pipeline_mode = #tpu.pipeline_mode<synchronous>, transform_indices = @transform_2, window_bounds = array<i64: 32, 64>}, {pipeline_mode = #tpu.pipeline_mode<synchronous>, transform_indices = @transform_3, window_bounds = array<i64: 1, 64>}, {pipeline_mode = #tpu.pipeline_mode<synchronous>, transform_indices = @transform_4, window_bounds = array<i64: 32, 32>}, {pipeline_mode = #tpu.pipeline_mode<synchronous>, transform_indices = @transform_5, window_bounds = array<i64: 8, 32>}, {pipeline_mode = #tpu.pipeline_mode<synchronous>, transform_indices = @transform_6, window_bounds = array<i64: 8, 32>}, {pipeline_mode = #tpu.pipeline_mode<synchronous>, transform_indices = @transform_7, window_bounds = array<i64: 32, 32>}, {pipeline_mode = #tpu.pipeline_mode<synchronous>, transform_indices = @transform_8, window_bounds = array<i64: 1, 32>}, {pipeline_mode = #tpu.pipeline_mode<synchronous>, transform_indices = @transform_9, window_bounds = array<i64: 32, 128>}, {pipeline_mode = #tpu.pipeline_mode<synchronous>, transform_indices = @transform_10, window_bounds = array<i64: 64, 32>}, {transform_indices = @transform_11, window_bounds = array<i64: 8, 32>}]} {
    %c0 = arith.constant 0 : index
    %c0_0 = arith.constant 0 : index
    %0 = vector.load %arg1[%c0, %c0_0] : memref<8x32xf32, #tpu.memory_space<vmem>>, vector<8x32xf32>
    %1 = arith.mulf %0, %0 : vector<8x32xf32>
    %cst = arith.constant dense<0.000000e+00> : vector<8xf32>
    %2 = vector.multi_reduction <add>, %1, %cst [1] : vector<8x32xf32> to vector<8xf32>
    %3 = vector.shape_cast %2 : vector<8xf32> to vector<8x1xf32>
    %cst_1 = arith.constant 3.200000e+01 : f32
    %4 = vector.broadcast %cst_1 : f32 to vector<8x1xf32>
    %5 = arith.divf %3, %4 : vector<8x1xf32>
    %cst_2 = arith.constant 9.99999997E-7 : f32
    %6 = vector.broadcast %cst_2 : f32 to vector<8x1xf32>
    %7 = arith.addf %5, %6 : vector<8x1xf32>
    %8 = math.rsqrt %7 : vector<8x1xf32>
    %9 = vector.broadcast %8 : vector<8x1xf32> to vector<8x32xf32>
    %10 = arith.mulf %0, %9 : vector<8x32xf32>
    %c0_3 = arith.constant 0 : index
    %c0_4 = arith.constant 0 : index
    %11 = vector.load %arg2[%c0_3, %c0_4] : memref<1x32xf32, #tpu.memory_space<vmem>>, vector<1x32xf32>
    %12 = vector.broadcast %11 : vector<1x32xf32> to vector<8x32xf32>
    %13 = arith.mulf %10, %12 : vector<8x32xf32>
    %c0_5 = arith.constant 0 : index
    %c0_6 = arith.constant 0 : index
    %14 = vector.load %arg3[%c0_5, %c0_6] : memref<32x64xf32, #tpu.memory_space<vmem>>, vector<32x64xf32>
    %cst_7 = arith.constant dense<0.000000e+00> : vector<8x64xf32>
    %15 = tpu.matmul %13, %14, %cst_7 {dimension_numbers = #tpu.dot_dimension_numbers<[1], [0], [0], [1], [0, 0, 1, 1], [], []>} : vector<8x32xf32>, vector<32x64xf32>, vector<8x64xf32> -> vector<8x64xf32>
    %c0_8 = arith.constant 0 : index
    %c0_9 = arith.constant 0 : index
    %16 = vector.load %arg4[%c0_8, %c0_9] : memref<1x64xf32, #tpu.memory_space<vmem>>, vector<1x64xf32>
    %17 = vector.broadcast %16 : vector<1x64xf32> to vector<8x64xf32>
    %18 = arith.addf %15, %17 : vector<8x64xf32>
    %19 = vector.extract_strided_slice %18 {offsets = [0, 0], sizes = [8, 32], strides = [1, 1]} : vector<8x64xf32> to vector<8x32xf32>
    %20 = vector.extract_strided_slice %18 {offsets = [0, 32], sizes = [8, 16], strides = [1, 1]} : vector<8x64xf32> to vector<8x16xf32>
    %21 = vector.extract_strided_slice %18 {offsets = [0, 48], sizes = [8, 16], strides = [1, 1]} : vector<8x64xf32> to vector<8x16xf32>
    %c0_10 = arith.constant 0 : index
    %c0_11 = arith.constant 0 : index
    %22 = vector.load %arg6[%c0_10, %c0_11] : memref<8x32xf32, #tpu.memory_space<vmem>>, vector<8x32xf32>
    %c0_12 = arith.constant 0 : index
    %c0_13 = arith.constant 0 : index
    %23 = vector.load %arg7[%c0_12, %c0_13] : memref<8x32xf32, #tpu.memory_space<vmem>>, vector<8x32xf32>
    %c0_14 = arith.constant 0 : index
    %c0_15 = arith.constant 0 : index
    %24 = vector.load %arg5[%c0_14, %c0_15] : memref<32x32xf32, #tpu.memory_space<vmem>>, vector<32x32xf32>
    %25 = vector.extract_strided_slice %22 {offsets = [0, 0], sizes = [8, 16], strides = [1, 1]} : vector<8x32xf32> to vector<8x16xf32>
    %26 = vector.extract_strided_slice %23 {offsets = [0, 0], sizes = [8, 16], strides = [1, 1]} : vector<8x32xf32> to vector<8x16xf32>
    %27 = vector.extract_strided_slice %24 {offsets = [0, 0], sizes = [16, 16], strides = [1, 1]} : vector<32x32xf32> to vector<16x16xf32>
    %28 = arith.mulf %19, %22 : vector<8x32xf32>
    %cst_16 = arith.constant dense<0.000000e+00> : vector<8x32xf32>
    %29 = tpu.matmul %19, %24, %cst_16 {dimension_numbers = #tpu.dot_dimension_numbers<[1], [0], [0], [1], [0, 0, 1, 1], [], []>} : vector<8x32xf32>, vector<32x32xf32>, vector<8x32xf32> -> vector<8x32xf32>
    %30 = arith.mulf %29, %23 : vector<8x32xf32>
    %31 = arith.addf %28, %30 : vector<8x32xf32>
    %32 = arith.mulf %20, %25 : vector<8x16xf32>
    %cst_17 = arith.constant dense<0.000000e+00> : vector<8x16xf32>
    %33 = tpu.matmul %20, %27, %cst_17 {dimension_numbers = #tpu.dot_dimension_numbers<[1], [0], [0], [1], [0, 0, 1, 1], [], []>} : vector<8x16xf32>, vector<16x16xf32>, vector<8x16xf32> -> vector<8x16xf32>
    %34 = arith.mulf %33, %26 : vector<8x16xf32>
    %35 = arith.addf %32, %34 : vector<8x16xf32>
    %36 = tpu.iota {dimensions = array<i32: 0>} : vector<8x8xi32>
    %37 = tpu.iota {dimensions = array<i32: 1>} : vector<8x8xi32>
    %38 = arith.cmpi sle, %37, %36 : vector<8x8xi32>
    %c0_18 = arith.constant 0 : index
    %c0_19 = arith.constant 0 : index
    %39 = vector.load %arg8[%c0_18, %c0_19] : memref<32x32xf32, #tpu.memory_space<vmem>>, vector<32x32xf32>
    %cst_20 = arith.constant 0.000000e+00 : f32
    %40 = vector.broadcast %cst_20 : f32 to vector<8x32xf32>
    %41 = vector.extract_strided_slice %31 {offsets = [0, 0], sizes = [8, 8], strides = [1, 1]} : vector<8x32xf32> to vector<8x8xf32>
    %42 = vector.extract_strided_slice %35 {offsets = [0, 0], sizes = [8, 8], strides = [1, 1]} : vector<8x16xf32> to vector<8x8xf32>
    %43 = vector.extract_strided_slice %21 {offsets = [0, 0], sizes = [8, 8], strides = [1, 1]} : vector<8x16xf32> to vector<8x8xf32>
    %cst_21 = arith.constant dense<0.000000e+00> : vector<8x8xf32>
    %44 = tpu.matmul %41, %42, %cst_21 {dimension_numbers = #tpu.dot_dimension_numbers<[1], [1], [0], [0], [0, 0, 1, 0], [], []>} : vector<8x8xf32>, vector<8x8xf32>, vector<8x8xf32> -> vector<8x8xf32>
    %cst_22 = arith.constant 0.353553385 : f32
    %45 = vector.broadcast %cst_22 : f32 to vector<8x8xf32>
    %46 = arith.mulf %44, %45 : vector<8x8xf32>
    %cst_23 = arith.constant -1.000000e+30 : f32
    %47 = vector.broadcast %cst_23 : f32 to vector<8x8xf32>
    %48 = arith.select %38, %46, %47 : vector<8x8xi1>, vector<8x8xf32>
    %cst_24 = arith.constant dense<0xFF800000> : vector<8xf32>
    %49 = vector.multi_reduction <maximumf>, %48, %cst_24 [1] : vector<8x8xf32> to vector<8xf32>
    %50 = vector.shape_cast %49 : vector<8xf32> to vector<8x1xf32>
    %51 = vector.broadcast %50 : vector<8x1xf32> to vector<8x8xf32>
    %52 = arith.subf %48, %51 : vector<8x8xf32>
    %53 = math.exp %52 : vector<8x8xf32>
    %cst_25 = arith.constant dense<0.000000e+00> : vector<8xf32>
    %54 = vector.multi_reduction <add>, %53, %cst_25 [1] : vector<8x8xf32> to vector<8xf32>
    %55 = vector.shape_cast %54 : vector<8xf32> to vector<8x1xf32>
    %56 = tpu.reciprocal %55 {approx = true} : vector<8x1xf32> -> vector<8x1xf32>
    %57 = vector.broadcast %56 : vector<8x1xf32> to vector<8x8xf32>
    %58 = arith.mulf %53, %57 : vector<8x8xf32>
    %cst_26 = arith.constant dense<0.000000e+00> : vector<8x8xf32>
    %59 = tpu.matmul %58, %43, %cst_26 {dimension_numbers = #tpu.dot_dimension_numbers<[1], [0], [0], [1], [0, 0, 1, 1], [], []>} : vector<8x8xf32>, vector<8x8xf32>, vector<8x8xf32> -> vector<8x8xf32>
    %60 = vector.extract_strided_slice %39 {offsets = [0, 0], sizes = [8, 32], strides = [1, 1]} : vector<32x32xf32> to vector<8x32xf32>
    %cst_27 = arith.constant dense<0.000000e+00> : vector<8x32xf32>
    %61 = tpu.matmul %59, %60, %cst_27 {dimension_numbers = #tpu.dot_dimension_numbers<[1], [0], [0], [1], [0, 0, 1, 1], [], []>} : vector<8x8xf32>, vector<8x32xf32>, vector<8x32xf32> -> vector<8x32xf32>
    %62 = arith.addf %40, %61 : vector<8x32xf32>
    %63 = vector.extract_strided_slice %31 {offsets = [0, 8], sizes = [8, 8], strides = [1, 1]} : vector<8x32xf32> to vector<8x8xf32>
    %64 = vector.extract_strided_slice %35 {offsets = [0, 0], sizes = [8, 8], strides = [1, 1]} : vector<8x16xf32> to vector<8x8xf32>
    %65 = vector.extract_strided_slice %21 {offsets = [0, 0], sizes = [8, 8], strides = [1, 1]} : vector<8x16xf32> to vector<8x8xf32>
    %cst_28 = arith.constant dense<0.000000e+00> : vector<8x8xf32>
    %66 = tpu.matmul %63, %64, %cst_28 {dimension_numbers = #tpu.dot_dimension_numbers<[1], [1], [0], [0], [0, 0, 1, 0], [], []>} : vector<8x8xf32>, vector<8x8xf32>, vector<8x8xf32> -> vector<8x8xf32>
    %cst_29 = arith.constant 0.353553385 : f32
    %67 = vector.broadcast %cst_29 : f32 to vector<8x8xf32>
    %68 = arith.mulf %66, %67 : vector<8x8xf32>
    %cst_30 = arith.constant -1.000000e+30 : f32
    %69 = vector.broadcast %cst_30 : f32 to vector<8x8xf32>
    %70 = arith.select %38, %68, %69 : vector<8x8xi1>, vector<8x8xf32>
    %cst_31 = arith.constant dense<0xFF800000> : vector<8xf32>
    %71 = vector.multi_reduction <maximumf>, %70, %cst_31 [1] : vector<8x8xf32> to vector<8xf32>
    %72 = vector.shape_cast %71 : vector<8xf32> to vector<8x1xf32>
    %73 = vector.broadcast %72 : vector<8x1xf32> to vector<8x8xf32>
    %74 = arith.subf %70, %73 : vector<8x8xf32>
    %75 = math.exp %74 : vector<8x8xf32>
    %cst_32 = arith.constant dense<0.000000e+00> : vector<8xf32>
    %76 = vector.multi_reduction <add>, %75, %cst_32 [1] : vector<8x8xf32> to vector<8xf32>
    %77 = vector.shape_cast %76 : vector<8xf32> to vector<8x1xf32>
    %78 = tpu.reciprocal %77 {approx = true} : vector<8x1xf32> -> vector<8x1xf32>
    %79 = vector.broadcast %78 : vector<8x1xf32> to vector<8x8xf32>
    %80 = arith.mulf %75, %79 : vector<8x8xf32>
    %cst_33 = arith.constant dense<0.000000e+00> : vector<8x8xf32>
    %81 = tpu.matmul %80, %65, %cst_33 {dimension_numbers = #tpu.dot_dimension_numbers<[1], [0], [0], [1], [0, 0, 1, 1], [], []>} : vector<8x8xf32>, vector<8x8xf32>, vector<8x8xf32> -> vector<8x8xf32>
    %82 = vector.extract_strided_slice %39 {offsets = [8, 0], sizes = [8, 32], strides = [1, 1]} : vector<32x32xf32> to vector<8x32xf32>
    %cst_34 = arith.constant dense<0.000000e+00> : vector<8x32xf32>
    %83 = tpu.matmul %81, %82, %cst_34 {dimension_numbers = #tpu.dot_dimension_numbers<[1], [0], [0], [1], [0, 0, 1, 1], [], []>} : vector<8x8xf32>, vector<8x32xf32>, vector<8x32xf32> -> vector<8x32xf32>
    %84 = arith.addf %62, %83 : vector<8x32xf32>
    %85 = vector.extract_strided_slice %31 {offsets = [0, 16], sizes = [8, 8], strides = [1, 1]} : vector<8x32xf32> to vector<8x8xf32>
    %86 = vector.extract_strided_slice %35 {offsets = [0, 8], sizes = [8, 8], strides = [1, 1]} : vector<8x16xf32> to vector<8x8xf32>
    %87 = vector.extract_strided_slice %21 {offsets = [0, 8], sizes = [8, 8], strides = [1, 1]} : vector<8x16xf32> to vector<8x8xf32>
    %cst_35 = arith.constant dense<0.000000e+00> : vector<8x8xf32>
    %88 = tpu.matmul %85, %86, %cst_35 {dimension_numbers = #tpu.dot_dimension_numbers<[1], [1], [0], [0], [0, 0, 1, 0], [], []>} : vector<8x8xf32>, vector<8x8xf32>, vector<8x8xf32> -> vector<8x8xf32>
    %cst_36 = arith.constant 0.353553385 : f32
    %89 = vector.broadcast %cst_36 : f32 to vector<8x8xf32>
    %90 = arith.mulf %88, %89 : vector<8x8xf32>
    %cst_37 = arith.constant -1.000000e+30 : f32
    %91 = vector.broadcast %cst_37 : f32 to vector<8x8xf32>
    %92 = arith.select %38, %90, %91 : vector<8x8xi1>, vector<8x8xf32>
    %cst_38 = arith.constant dense<0xFF800000> : vector<8xf32>
    %93 = vector.multi_reduction <maximumf>, %92, %cst_38 [1] : vector<8x8xf32> to vector<8xf32>
    %94 = vector.shape_cast %93 : vector<8xf32> to vector<8x1xf32>
    %95 = vector.broadcast %94 : vector<8x1xf32> to vector<8x8xf32>
    %96 = arith.subf %92, %95 : vector<8x8xf32>
    %97 = math.exp %96 : vector<8x8xf32>
    %cst_39 = arith.constant dense<0.000000e+00> : vector<8xf32>
    %98 = vector.multi_reduction <add>, %97, %cst_39 [1] : vector<8x8xf32> to vector<8xf32>
    %99 = vector.shape_cast %98 : vector<8xf32> to vector<8x1xf32>
    %100 = tpu.reciprocal %99 {approx = true} : vector<8x1xf32> -> vector<8x1xf32>
    %101 = vector.broadcast %100 : vector<8x1xf32> to vector<8x8xf32>
    %102 = arith.mulf %97, %101 : vector<8x8xf32>
    %cst_40 = arith.constant dense<0.000000e+00> : vector<8x8xf32>
    %103 = tpu.matmul %102, %87, %cst_40 {dimension_numbers = #tpu.dot_dimension_numbers<[1], [0], [0], [1], [0, 0, 1, 1], [], []>} : vector<8x8xf32>, vector<8x8xf32>, vector<8x8xf32> -> vector<8x8xf32>
    %104 = vector.extract_strided_slice %39 {offsets = [16, 0], sizes = [8, 32], strides = [1, 1]} : vector<32x32xf32> to vector<8x32xf32>
    %cst_41 = arith.constant dense<0.000000e+00> : vector<8x32xf32>
    %105 = tpu.matmul %103, %104, %cst_41 {dimension_numbers = #tpu.dot_dimension_numbers<[1], [0], [0], [1], [0, 0, 1, 1], [], []>} : vector<8x8xf32>, vector<8x32xf32>, vector<8x32xf32> -> vector<8x32xf32>
    %106 = arith.addf %84, %105 : vector<8x32xf32>
    %107 = vector.extract_strided_slice %31 {offsets = [0, 24], sizes = [8, 8], strides = [1, 1]} : vector<8x32xf32> to vector<8x8xf32>
    %108 = vector.extract_strided_slice %35 {offsets = [0, 8], sizes = [8, 8], strides = [1, 1]} : vector<8x16xf32> to vector<8x8xf32>
    %109 = vector.extract_strided_slice %21 {offsets = [0, 8], sizes = [8, 8], strides = [1, 1]} : vector<8x16xf32> to vector<8x8xf32>
    %cst_42 = arith.constant dense<0.000000e+00> : vector<8x8xf32>
    %110 = tpu.matmul %107, %108, %cst_42 {dimension_numbers = #tpu.dot_dimension_numbers<[1], [1], [0], [0], [0, 0, 1, 0], [], []>} : vector<8x8xf32>, vector<8x8xf32>, vector<8x8xf32> -> vector<8x8xf32>
    %cst_43 = arith.constant 0.353553385 : f32
    %111 = vector.broadcast %cst_43 : f32 to vector<8x8xf32>
    %112 = arith.mulf %110, %111 : vector<8x8xf32>
    %cst_44 = arith.constant -1.000000e+30 : f32
    %113 = vector.broadcast %cst_44 : f32 to vector<8x8xf32>
    %114 = arith.select %38, %112, %113 : vector<8x8xi1>, vector<8x8xf32>
    %cst_45 = arith.constant dense<0xFF800000> : vector<8xf32>
    %115 = vector.multi_reduction <maximumf>, %114, %cst_45 [1] : vector<8x8xf32> to vector<8xf32>
    %116 = vector.shape_cast %115 : vector<8xf32> to vector<8x1xf32>
    %117 = vector.broadcast %116 : vector<8x1xf32> to vector<8x8xf32>
    %118 = arith.subf %114, %117 : vector<8x8xf32>
    %119 = math.exp %118 : vector<8x8xf32>
    %cst_46 = arith.constant dense<0.000000e+00> : vector<8xf32>
    %120 = vector.multi_reduction <add>, %119, %cst_46 [1] : vector<8x8xf32> to vector<8xf32>
    %121 = vector.shape_cast %120 : vector<8xf32> to vector<8x1xf32>
    %122 = tpu.reciprocal %121 {approx = true} : vector<8x1xf32> -> vector<8x1xf32>
    %123 = vector.broadcast %122 : vector<8x1xf32> to vector<8x8xf32>
    %124 = arith.mulf %119, %123 : vector<8x8xf32>
    %cst_47 = arith.constant dense<0.000000e+00> : vector<8x8xf32>
    %125 = tpu.matmul %124, %109, %cst_47 {dimension_numbers = #tpu.dot_dimension_numbers<[1], [0], [0], [1], [0, 0, 1, 1], [], []>} : vector<8x8xf32>, vector<8x8xf32>, vector<8x8xf32> -> vector<8x8xf32>
    %126 = vector.extract_strided_slice %39 {offsets = [24, 0], sizes = [8, 32], strides = [1, 1]} : vector<32x32xf32> to vector<8x32xf32>
    %cst_48 = arith.constant dense<0.000000e+00> : vector<8x32xf32>
    %127 = tpu.matmul %125, %126, %cst_48 {dimension_numbers = #tpu.dot_dimension_numbers<[1], [0], [0], [1], [0, 0, 1, 1], [], []>} : vector<8x8xf32>, vector<8x32xf32>, vector<8x32xf32> -> vector<8x32xf32>
    %128 = arith.addf %106, %127 : vector<8x32xf32>
    %129 = arith.addf %0, %128 : vector<8x32xf32>
    %130 = arith.mulf %129, %129 : vector<8x32xf32>
    %cst_49 = arith.constant dense<0.000000e+00> : vector<8xf32>
    %131 = vector.multi_reduction <add>, %130, %cst_49 [1] : vector<8x32xf32> to vector<8xf32>
    %132 = vector.shape_cast %131 : vector<8xf32> to vector<8x1xf32>
    %cst_50 = arith.constant 3.200000e+01 : f32
    %133 = vector.broadcast %cst_50 : f32 to vector<8x1xf32>
    %134 = arith.divf %132, %133 : vector<8x1xf32>
    %cst_51 = arith.constant 9.99999997E-7 : f32
    %135 = vector.broadcast %cst_51 : f32 to vector<8x1xf32>
    %136 = arith.addf %134, %135 : vector<8x1xf32>
    %137 = math.rsqrt %136 : vector<8x1xf32>
    %138 = vector.broadcast %137 : vector<8x1xf32> to vector<8x32xf32>
    %139 = arith.mulf %129, %138 : vector<8x32xf32>
    %c0_52 = arith.constant 0 : index
    %c0_53 = arith.constant 0 : index
    %140 = vector.load %arg9[%c0_52, %c0_53] : memref<1x32xf32, #tpu.memory_space<vmem>>, vector<1x32xf32>
    %141 = vector.broadcast %140 : vector<1x32xf32> to vector<8x32xf32>
    %142 = arith.mulf %139, %141 : vector<8x32xf32>
    %c0_54 = arith.constant 0 : index
    %c0_55 = arith.constant 0 : index
    %143 = vector.load %arg10[%c0_54, %c0_55] : memref<32x128xf32, #tpu.memory_space<vmem>>, vector<32x128xf32>
    %cst_56 = arith.constant dense<0.000000e+00> : vector<8x128xf32>
    %144 = tpu.matmul %142, %143, %cst_56 {dimension_numbers = #tpu.dot_dimension_numbers<[1], [0], [0], [1], [0, 0, 1, 1], [], []>} : vector<8x32xf32>, vector<32x128xf32>, vector<8x128xf32> -> vector<8x128xf32>
    %145 = vector.extract_strided_slice %144 {offsets = [0, 0], sizes = [8, 64], strides = [1, 1]} : vector<8x128xf32> to vector<8x64xf32>
    %146 = vector.extract_strided_slice %144 {offsets = [0, 64], sizes = [8, 64], strides = [1, 1]} : vector<8x128xf32> to vector<8x64xf32>
    %147 = arith.negf %145 : vector<8x64xf32>
    %148 = math.exp %147 : vector<8x64xf32>
    %cst_57 = arith.constant 1.000000e+00 : f32
    %149 = vector.broadcast %cst_57 : f32 to vector<8x64xf32>
    %150 = arith.addf %149, %148 : vector<8x64xf32>
    %151 = arith.divf %149, %150 : vector<8x64xf32>
    %152 = arith.mulf %145, %151 : vector<8x64xf32>
    %153 = arith.mulf %152, %146 : vector<8x64xf32>
    %c0_58 = arith.constant 0 : index
    %c0_59 = arith.constant 0 : index
    %154 = vector.load %arg11[%c0_58, %c0_59] : memref<64x32xf32, #tpu.memory_space<vmem>>, vector<64x32xf32>
    %cst_60 = arith.constant dense<0.000000e+00> : vector<8x32xf32>
    %155 = tpu.matmul %153, %154, %cst_60 {dimension_numbers = #tpu.dot_dimension_numbers<[1], [0], [0], [1], [0, 0, 1, 1], [], []>} : vector<8x64xf32>, vector<64x32xf32>, vector<8x32xf32> -> vector<8x32xf32>
    %156 = arith.addf %129, %155 : vector<8x32xf32>
    %c0_61 = arith.constant 0 : index
    %c0_62 = arith.constant 0 : index
    %157 = vector.load %arg12[%c0_61, %c0_62] : memref<8x32xf32, #tpu.memory_space<vmem>>, vector<8x32xf32>
    tpu.vector_store %arg12[%c0_61, %c0_62], %156 {strides = array<i32>} : memref<8x32xf32, #tpu.memory_space<vmem>>, vector<8x32xf32>,
    return
  }
  func.func @transform_0(%arg0: i32) -> (i32, i32) {
    %c0_i32 = arith.constant 0 : i32
    %c0_i32_0 = arith.constant 0 : i32
    return %arg0, %c0_i32 : i32, i32
  }
  func.func @transform_1(%arg0: i32) -> (i32, i32) {
    %c0_i32 = arith.constant 0 : i32
    %c0_i32_0 = arith.constant 0 : i32
    %c0_i32_1 = arith.constant 0 : i32
    return %c0_i32, %c0_i32_0 : i32, i32
  }
  func.func @transform_2(%arg0: i32) -> (i32, i32) {
    %c0_i32 = arith.constant 0 : i32
    %c0_i32_0 = arith.constant 0 : i32
    %c0_i32_1 = arith.constant 0 : i32
    return %c0_i32, %c0_i32_0 : i32, i32
  }
  func.func @transform_3(%arg0: i32) -> (i32, i32) {
    %c0_i32 = arith.constant 0 : i32
    %c0_i32_0 = arith.constant 0 : i32
    %c0_i32_1 = arith.constant 0 : i32
    return %c0_i32, %c0_i32_0 : i32, i32
  }
  func.func @transform_4(%arg0: i32) -> (i32, i32) {
    %c0_i32 = arith.constant 0 : i32
    %c0_i32_0 = arith.constant 0 : i32
    %c0_i32_1 = arith.constant 0 : i32
    return %c0_i32, %c0_i32_0 : i32, i32
  }
  func.func @transform_5(%arg0: i32) -> (i32, i32) {
    %c0_i32 = arith.constant 0 : i32
    %c0_i32_0 = arith.constant 0 : i32
    %c0_i32_1 = arith.constant 0 : i32
    return %c0_i32, %c0_i32_0 : i32, i32
  }
  func.func @transform_6(%arg0: i32) -> (i32, i32) {
    %c0_i32 = arith.constant 0 : i32
    %c0_i32_0 = arith.constant 0 : i32
    %c0_i32_1 = arith.constant 0 : i32
    return %c0_i32, %c0_i32_0 : i32, i32
  }
  func.func @transform_7(%arg0: i32) -> (i32, i32) {
    %c0_i32 = arith.constant 0 : i32
    %c0_i32_0 = arith.constant 0 : i32
    %c0_i32_1 = arith.constant 0 : i32
    return %c0_i32, %c0_i32_0 : i32, i32
  }
  func.func @transform_8(%arg0: i32) -> (i32, i32) {
    %c0_i32 = arith.constant 0 : i32
    %c0_i32_0 = arith.constant 0 : i32
    %c0_i32_1 = arith.constant 0 : i32
    return %c0_i32, %c0_i32_0 : i32, i32
  }
  func.func @transform_9(%arg0: i32) -> (i32, i32) {
    %c0_i32 = arith.constant 0 : i32
    %c0_i32_0 = arith.constant 0 : i32
    %c0_i32_1 = arith.constant 0 : i32
    return %c0_i32, %c0_i32_0 : i32, i32
  }
  func.func @transform_10(%arg0: i32) -> (i32, i32) {
    %c0_i32 = arith.constant 0 : i32
    %c0_i32_0 = arith.constant 0 : i32
    %c0_i32_1 = arith.constant 0 : i32
    return %c0_i32, %c0_i32_0 : i32, i32
  }
  func.func @transform_11(%arg0: i32) -> (i32, i32) {
    %c0_i32 = arith.constant 0 : i32
    %c0_i32_0 = arith.constant 0 : i32
    return %arg0, %c0_i32 : i32, i32
  }
}

</mosaic_0001>

<llo_original>
// kernel: tpu_custom_call.1
$region0: #{tpu_custom_call.1}
  #allocation0 [shape = 'u32[]', space=smem, size = 0x4, offset = 0x4, fixed_abs, tag = 'smem constant byte address 0x4 - core index']
  #allocation1 [shape = 'u32[144,128]{1,0:T(1,128)}', space=vmem, size = 0x12000, scoped, tag = 'internal scratch']
  %s0 = inlined_call_operand.hbm [shape: f32[16,32], index: 0, kind: input, shape index: {}]
  %s1 = inlined_call_operand.vmem [shape: f32[1,32], index: 1, kind: input, shape index: {}]
  %s2 = inlined_call_operand.vmem [shape: f32[32,64], index: 2, kind: input, shape index: {}]
  %s3 = inlined_call_operand.hbm [shape: f32[1,64], index: 3, kind: input, shape index: {}]
  %s4 = inlined_call_operand.vmem [shape: f32[32,32], index: 4, kind: input, shape index: {}]
  %s5 = inlined_call_operand.vmem [shape: f32[8,32], index: 5, kind: input, shape index: {}]
  %s6 = inlined_call_operand.hbm [shape: f32[8,32], index: 6, kind: input, shape index: {}]
  %s7 = inlined_call_operand.vmem [shape: f32[32,32], index: 7, kind: input, shape index: {}]
  %s8 = inlined_call_operand.vmem [shape: f32[1,32], index: 8, kind: input, shape index: {}]
  %s9 = inlined_call_operand.hbm [shape: f32[32,128], index: 9, kind: input, shape index: {}]
  %s10 = inlined_call_operand.vmem [shape: f32[64,32], index: 10, kind: input, shape index: {}]
  %s11 = inlined_call_operand.hbm [shape: f32[16,32], index: 11, kind: output, shape index: {}]
  %s12 = sld [smem:[#allocation0]]
  $region93: #{tpu_custom_call.1} parent=0
    _
  %s14 = ssub.s32 1, %s12
  %s15 = scalar_select 0, %s14, %s12
  $region1: #{tpu_custom_call.1} parent=0
    #allocation2 [shape = 'u8[8192]{0}', space=vmem, size = 0x2000, scoped, tag = 'input window, operand 0']
    #allocation3 [shape = 's32[2]{0}', space=sflag, size = 0x8, scoped, tag = 'scoped memory for tpu_custom_call.1']
    #allocation4 [shape = 's32[2]{0}', space=sflag, size = 0x8, scoped, tag = 'scoped memory for tpu_custom_call.1']
    #allocation5 [shape = 'u8[512]{0}', space=vmem, size = 0x400, scoped, tag = 'input window, operand 3, single buffered']
    #allocation6 [shape = 's32[1]{0}', space=sflag, size = 0x4, scoped, tag = 'scoped memory for tpu_custom_call.1']
    #allocation7 [shape = 'u8[4096]{0}', space=vmem, size = 0x1000, scoped, tag = 'input window, operand 6, single buffered']
    #allocation8 [shape = 'u8[16384]{0}', space=vmem, size = 0x4000, scoped, tag = 'input window, operand 9, single buffered']
    #allocation9 [shape = 's32[1]{0}', space=sflag, size = 0x4, scoped, tag = 'scoped memory for tpu_custom_call.1']
    #allocation10 [shape = 'u8[8192]{0}', space=vmem, size = 0x2000, scoped, tag = 'output window, operand 0']
    %16 = vsyncpa [#allocation3], 0
    %s17 = scalar_lea.sflag [#allocation3], 1
    %18 = vsyncpa %s17, 0
    %19 = vsyncpa [#allocation6], 0
    %20 = vsyncpa [#allocation9], 0
    %21 = vsyncpa [#allocation4], 0
    %s22 = scalar_lea.sflag [#allocation4], 1
    %23 = vsyncpa %s22, 0
    loop: start=0, step=1, limit=4
    $region2: #{tpu_custom_call.1} parent=1 // loop_pre_header
      _
    $region3: #{tpu_custom_call.1} parent=1 // loop_header
      %s25 = sphi 0, %s29
      %p26 = scmp.ge.s32.totalorder %s25, 4
      %s35 = sphi 0, %s37
      %s38 = sphi 0, %s35
      %s39 = sphi 0, %s38
      %s55 = sphi 0, %s39
      %s59 = sphi 0, %s59
      %s61 = sphi 0, %s59
      %s62 = sphi 0, %s61
      %s76 = sphi 0, %s62
      %s80 = sphi 0, %s80
      %s82 = sphi 0, %s80
      %s83 = sphi 0, %s82
      %s97 = sphi 0, %s83
      %s101 = sphi 0, %s101
      %s103 = sphi 0, %s101
      %s104 = sphi 0, %s103
      %s118 = sphi 0, %s104
      %s122 = sphi 0, %s122
      %s124 = sphi 0, %s122
      %s125 = sphi 0, %s124
      %s139 = sphi 0, %s125
      %s143 = sphi 0, %s143
      %s145 = sphi 0, %s143
      %s146 = sphi 0, %s145
      %s160 = sphi 0, %s146
      %s164 = sphi 0, %s164
      %s166 = sphi 0, %s164
      %s167 = sphi 0, %s166
      %s181 = sphi 0, %s167
      %s185 = sphi 0, %s185
      %s187 = sphi 0, %s185
      %s188 = sphi 0, %s187
      %s202 = sphi 0, %s188
      %s206 = sphi 0, %s206
      %s208 = sphi 0, %s206
      %s209 = sphi 0, %s208
      %s223 = sphi 0, %s209
      %s227 = sphi 0, %s227
      %s229 = sphi 0, %s227
      %s230 = sphi 0, %s229
      %s244 = sphi 0, %s230
      %s248 = sphi 0, %s248
      %s250 = sphi 0, %s248
      %s251 = sphi 0, %s250
      %s265 = sphi 0, %s251
      %s271 = sphi 0, %s273
      %s274 = sphi 0, %s271
      %s275 = sphi 0, %s274
      %s291 = sphi 0, %s275
    $region4: #{tpu_custom_call.1} parent=1 // loop_header_branch
      %28 = sbr.rel (%p26) target = $region8
    $region5: #{tpu_custom_call.1} parent=1 // loop_body
      %s30 = ssub.s32 %s25, 1
      %s31 = ssub.s32 %s25, 2
      %s32 = sadd.s32 %s25, 1
      %s33 = ssub.s32 %s25, %s32
      %p34 = scmp.eq.s32.totalorder %s33, 0
      %s36 = sadd.s32 %s35, 1
      %s37 = scalar_select %p34, %s35, %s36
      %p40 = pneg %p34
      %p41 = scmp.eq.s32.totalorder %s25, 1
      %p42 = por %p40, %p41
      %p43 = scmp.ne.s32.totalorder %s35, %s38
      %p44 = scmp.eq.s32.totalorder %s25, 0
      %p45 = por %p43, %p44
      %p46 = scmp.ne.s32.totalorder %s35, %s38
      %p47 = scmp.eq.s32.totalorder %s30, 1
      %p48 = por %p46, %p47
      %p49 = scmp.ne.s32.totalorder %s38, %s39
      %p50 = scmp.eq.s32.totalorder %s30, 0
      %p51 = por %p49, %p50
      %p52 = scmp.ne.s32.totalorder %s38, %s39
      %p53 = scmp.eq.s32.totalorder %s31, 1
      %p54 = por %p52, %p53
      %p56 = scmp.ne.s32.totalorder %s39, %s55
      %p57 = scmp.eq.s32.totalorder %s31, 0
      %p58 = por %p56, %p57
      %s60 = sadd.s32 %s59, 1
      %p63 = scmp.eq.s32.totalorder %s25, 1
      %p64 = scmp.ne.s32.totalorder %s59, %s61
      %p65 = scmp.eq.s32.totalorder %s25, 0
      %p66 = por %p64, %p65
      %p67 = scmp.ne.s32.totalorder %s59, %s61
      %p68 = scmp.eq.s32.totalorder %s30, 1
      %p69 = por %p67, %p68
      %p70 = scmp.ne.s32.totalorder %s61, %s62
      %p71 = scmp.eq.s32.totalorder %s30, 0
      %p72 = por %p70, %p71
      %p73 = scmp.ne.s32.totalorder %s61, %s62
      %p74 = scmp.eq.s32.totalorder %s31, 1
      %p75 = por %p73, %p74
      %p77 = scmp.ne.s32.totalorder %s62, %s76
      %p78 = scmp.eq.s32.totalorder %s31, 0
      %p79 = por %p77, %p78
      %s81 = sadd.s32 %s80, 1
      %p84 = scmp.eq.s32.totalorder %s25, 1
      %p85 = scmp.ne.s32.totalorder %s80, %s82
      %p86 = scmp.eq.s32.totalorder %s25, 0
      %p87 = por %p85, %p86
      %p88 = scmp.ne.s32.totalorder %s80, %s82
      %p89 = scmp.eq.s32.totalorder %s30, 1
      %p90 = por %p88, %p89
      %p91 = scmp.ne.s32.totalorder %s82, %s83
      %p92 = scmp.eq.s32.totalorder %s30, 0
      %p93 = por %p91, %p92
      %p94 = scmp.ne.s32.totalorder %s82, %s83
      %p95 = scmp.eq.s32.totalorder %s31, 1
      %p96 = por %p94, %p95
      %p98 = scmp.ne.s32.totalorder %s83, %s97
      %p99 = scmp.eq.s32.totalorder %s31, 0
      %p100 = por %p98, %p99
      %s102 = sadd.s32 %s101, 1
      %p105 = scmp.eq.s32.totalorder %s25, 1
      %p106 = scmp.ne.s32.totalorder %s101, %s103
      %p107 = scmp.eq.s32.totalorder %s25, 0
      %p108 = por %p106, %p107
      %p109 = scmp.ne.s32.totalorder %s101, %s103
      %p110 = scmp.eq.s32.totalorder %s30, 1
      %p111 = por %p109, %p110
      %p112 = scmp.ne.s32.totalorder %s103, %s104
      %p113 = scmp.eq.s32.totalorder %s30, 0
      %p114 = por %p112, %p113
      %p115 = scmp.ne.s32.totalorder %s103, %s104
      %p116 = scmp.eq.s32.totalorder %s31, 1
      %p117 = por %p115, %p116
      %p119 = scmp.ne.s32.totalorder %s104, %s118
      %p120 = scmp.eq.s32.totalorder %s31, 0
      %p121 = por %p119, %p120
      %s123 = sadd.s32 %s122, 1
      %p126 = scmp.eq.s32.totalorder %s25, 1
      %p127 = scmp.ne.s32.totalorder %s122, %s124
      %p128 = scmp.eq.s32.totalorder %s25, 0
      %p129 = por %p127, %p128
      %p130 = scmp.ne.s32.totalorder %s122, %s124
      %p131 = scmp.eq.s32.totalorder %s30, 1
      %p132 = por %p130, %p131
      %p133 = scmp.ne.s32.totalorder %s124, %s125
      %p134 = scmp.eq.s32.totalorder %s30, 0
      %p135 = por %p133, %p134
      %p136 = scmp.ne.s32.totalorder %s124, %s125
      %p137 = scmp.eq.s32.totalorder %s31, 1
      %p138 = por %p136, %p137
      %p140 = scmp.ne.s32.totalorder %s125, %s139
      %p141 = scmp.eq.s32.totalorder %s31, 0
      %p142 = por %p140, %p141
      %s144 = sadd.s32 %s143, 1
      %p147 = scmp.eq.s32.totalorder %s25, 1
      %p148 = scmp.ne.s32.totalorder %s143, %s145
      %p149 = scmp.eq.s32.totalorder %s25, 0
      %p150 = por %p148, %p149
      %p151 = scmp.ne.s32.totalorder %s143, %s145
      %p152 = scmp.eq.s32.totalorder %s30, 1
      %p153 = por %p151, %p152
      %p154 = scmp.ne.s32.totalorder %s145, %s146
      %p155 = scmp.eq.s32.totalorder %s30, 0
      %p156 = por %p154, %p155
      %p157 = scmp.ne.s32.totalorder %s145, %s146
      %p158 = scmp.eq.s32.totalorder %s31, 1
      %p159 = por %p157, %p158
      %p161 = scmp.ne.s32.totalorder %s146, %s160
      %p162 = scmp.eq.s32.totalorder %s31, 0
      %p163 = por %p161, %p162
      %s165 = sadd.s32 %s164, 1
      %p168 = scmp.eq.s32.totalorder %s25, 1
      %p169 = scmp.ne.s32.totalorder %s164, %s166
      %p170 = scmp.eq.s32.totalorder %s25, 0
      %p171 = por %p169, %p170
      %p172 = scmp.ne.s32.totalorder %s164, %s166
      %p173 = scmp.eq.s32.totalorder %s30, 1
      %p174 = por %p172, %p173
      %p175 = scmp.ne.s32.totalorder %s166, %s167
      %p176 = scmp.eq.s32.totalorder %s30, 0
      %p177 = por %p175, %p176
      %p178 = scmp.ne.s32.totalorder %s166, %s167
      %p179 = scmp.eq.s32.totalorder %s31, 1
      %p180 = por %p178, %p179
      %p182 = scmp.ne.s32.totalorder %s167, %s181
      %p183 = scmp.eq.s32.totalorder %s31, 0
      %p184 = por %p182, %p183
      %s186 = sadd.s32 %s185, 1
      %p189 = scmp.eq.s32.totalorder %s25, 1
      %p190 = scmp.ne.s32.totalorder %s185, %s187
      %p191 = scmp.eq.s32.totalorder %s25, 0
      %p192 = por %p190, %p191
      %p193 = scmp.ne.s32.totalorder %s185, %s187
      %p194 = scmp.eq.s32.totalorder %s30, 1
      %p195 = por %p193, %p194
      %p196 = scmp.ne.s32.totalorder %s187, %s188
      %p197 = scmp.eq.s32.totalorder %s30, 0
      %p198 = por %p196, %p197
      %p199 = scmp.ne.s32.totalorder %s187, %s188
      %p200 = scmp.eq.s32.totalorder %s31, 1
      %p201 = por %p199, %p200
      %p203 = scmp.ne.s32.totalorder %s188, %s202
      %p204 = scmp.eq.s32.totalorder %s31, 0
      %p205 = por %p203, %p204
      %s207 = sadd.s32 %s206, 1
      %p210 = scmp.eq.s32.totalorder %s25, 1
      %p211 = scmp.ne.s32.totalorder %s206, %s208
      %p212 = scmp.eq.s32.totalorder %s25, 0
      %p213 = por %p211, %p212
      %p214 = scmp.ne.s32.totalorder %s206, %s208
      %p215 = scmp.eq.s32.totalorder %s30, 1
      %p216 = por %p214, %p215
      %p217 = scmp.ne.s32.totalorder %s208, %s209
      %p218 = scmp.eq.s32.totalorder %s30, 0
      %p219 = por %p217, %p218
      %p220 = scmp.ne.s32.totalorder %s208, %s209
      %p221 = scmp.eq.s32.totalorder %s31, 1
      %p222 = por %p220, %p221
      %p224 = scmp.ne.s32.totalorder %s209, %s223
      %p225 = scmp.eq.s32.totalorder %s31, 0
      %p226 = por %p224, %p225
      %s228 = sadd.s32 %s227, 1
      %p231 = scmp.eq.s32.totalorder %s25, 1
      %p232 = scmp.ne.s32.totalorder %s227, %s229
      %p233 = scmp.eq.s32.totalorder %s25, 0
      %p234 = por %p232, %p233
      %p235 = scmp.ne.s32.totalorder %s227, %s229
      %p236 = scmp.eq.s32.totalorder %s30, 1
      %p237 = por %p235, %p236
      %p238 = scmp.ne.s32.totalorder %s229, %s230
      %p239 = scmp.eq.s32.totalorder %s30, 0
      %p240 = por %p238, %p239
      %p241 = scmp.ne.s32.totalorder %s229, %s230
      %p242 = scmp.eq.s32.totalorder %s31, 1
      %p243 = por %p241, %p242
      %p245 = scmp.ne.s32.totalorder %s230, %s244
      %p246 = scmp.eq.s32.totalorder %s31, 0
      %p247 = por %p245, %p246
      %s249 = sadd.s32 %s248, 1
      %p252 = scmp.eq.s32.totalorder %s25, 1
      %p253 = scmp.ne.s32.totalorder %s248, %s250
      %p254 = scmp.eq.s32.totalorder %s25, 0
      %p255 = por %p253, %p254
      %p256 = scmp.ne.s32.totalorder %s248, %s250
      %p257 = scmp.eq.s32.totalorder %s30, 1
      %p258 = por %p256, %p257
      %p259 = scmp.ne.s32.totalorder %s250, %s251
      %p260 = scmp.eq.s32.totalorder %s30, 0
      %p261 = por %p259, %p260
      %p262 = scmp.ne.s32.totalorder %s250, %s251
      %p263 = scmp.eq.s32.totalorder %s31, 1
      %p264 = por %p262, %p263
      %p266 = scmp.ne.s32.totalorder %s251, %s265
      %p267 = scmp.eq.s32.totalorder %s31, 0
      %p268 = por %p266, %p267
      %s269 = ssub.s32 %s25, %s32
      %p270 = scmp.eq.s32.totalorder %s269, 0
      %s272 = sadd.s32 %s271, 1
      %s273 = scalar_select %p270, %s271, %s272
      %p276 = pneg %p270
      %p277 = scmp.eq.s32.totalorder %s25, 1
      %p278 = por %p276, %p277
      %p279 = scmp.ne.s32.totalorder %s271, %s274
      %p280 = scmp.eq.s32.totalorder %s25, 0
      %p281 = por %p279, %p280
      %p282 = scmp.ne.s32.totalorder %s271, %s274
      %p283 = scmp.eq.s32.totalorder %s30, 1
      %p284 = por %p282, %p283
      %p285 = scmp.ne.s32.totalorder %s274, %s275
      %p286 = scmp.eq.s32.totalorder %s30, 0
      %p287 = por %p285, %p286
      %p288 = scmp.ne.s32.totalorder %s274, %s275
      %p289 = scmp.eq.s32.totalorder %s31, 1
      %p290 = por %p288, %p289
      %p292 = scmp.ne.s32.totalorder %s275, %s291
      %p293 = scmp.eq.s32.totalorder %s31, 0
      %p294 = por %p292, %p293
      %p295 = scmp.le.s32.totalorder 1, %s25
      %p296 = scmp.lt.s32.totalorder %s25, 3
      %p297 = pnand %p295, %p296
      %p298 = pneg %p297
      // Predicated region
      $region9: #{tpu_custom_call.1} parent=5 // pred_check
        _
      $region10: #{tpu_custom_call.1} parent=5 // pred_check_branch
        %300 = sbr.rel (%p297) target = $region12
      $region11: #{tpu_custom_call.1} parent=5 // pred_region
        %s301 = ssub.s32 %s25, 1
        // Predicated region
        $region13: #{tpu_custom_call.1} parent=11 // pred_check
          %p302 = pneg %p72
        $region14: #{tpu_custom_call.1} parent=11 // pred_check_branch
          %304 = sbr.rel (%p302) target = $region16
        $region15: #{tpu_custom_call.1} parent=11 // pred_region
          _
        $region16: #{tpu_custom_call.1} parent=11 // pred_fallthru
          _
        // Predicated region
        $region17: #{tpu_custom_call.1} parent=11 // pred_check
          %p305 = pneg %p93
        $region18: #{tpu_custom_call.1} parent=11 // pred_check_branch
          %307 = sbr.rel (%p305) target = $region20
        $region19: #{tpu_custom_call.1} parent=11 // pred_region
          _
        $region20: #{tpu_custom_call.1} parent=11 // pred_fallthru
          _
        // Predicated region
        $region21: #{tpu_custom_call.1} parent=11 // pred_check
          %p308 = pneg %p114
        $region22: #{tpu_custom_call.1} parent=11 // pred_check_branch
          %310 = sbr.rel (%p308) target = $region24
        $region23: #{tpu_custom_call.1} parent=11 // pred_region
          %s312 = ssub.s32 16, 16
          %313 = vsyncadd [#allocation6], %s312
          %s315 = sshll.u32 [#allocation5], 4
          %s316 = int_to_ptr.vmem [resolvable:$true] %s315
          %318 = dma.hbm_to_vmem [thread:$0]  %s3, 16, %s316, [#allocation6]
        $region24: #{tpu_custom_call.1} parent=11 // pred_fallthru
          _
        // Predicated region
        $region25: #{tpu_custom_call.1} parent=11 // pred_check
          %p319 = pneg %p135
        $region26: #{tpu_custom_call.1} parent=11 // pred_check_branch
          %321 = sbr.rel (%p319) target = $region28
        $region27: #{tpu_custom_call.1} parent=11 // pred_region
          _
        $region28: #{tpu_custom_call.1} parent=11 // pred_fallthru
          _
        // Predicated region
        $region29: #{tpu_custom_call.1} parent=11 // pred_check
          %p322 = pneg %p156
        $region30: #{tpu_custom_call.1} parent=11 // pred_check_branch
          %324 = sbr.rel (%p322) target = $region32
        $region31: #{tpu_custom_call.1} parent=11 // pred_region
          _
        $region32: #{tpu_custom_call.1} parent=11 // pred_fallthru
          _
        // Predicated region
        $region33: #{tpu_custom_call.1} parent=11 // pred_check
          %p325 = pneg %p177
        $region34: #{tpu_custom_call.1} parent=11 // pred_check_branch
          %327 = sbr.rel (%p325) target = $region36
        $region35: #{tpu_custom_call.1} parent=11 // pred_region
          %s329 = ssub.s32 128, 128
          %330 = vsyncadd [#allocation6], %s329
          %s332 = sshll.u32 [#allocation7], 4
          %s333 = int_to_ptr.vmem [resolvable:$true] %s332
          %335 = dma.hbm_to_vmem [thread:$0]  %s6, 128, %s333, [#allocation6]
        $region36: #{tpu_custom_call.1} parent=11 // pred_fallthru
          _
        // Predicated region
        $region37: #{tpu_custom_call.1} parent=11 // pred_check
          %p336 = pneg %p198
        $region38: #{tpu_custom_call.1} parent=11 // pred_check_branch
          %338 = sbr.rel (%p336) target = $region40
        $region39: #{tpu_custom_call.1} parent=11 // pred_region
          _
        $region40: #{tpu_custom_call.1} parent=11 // pred_fallthru
          _
        // Predicated region
        $region41: #{tpu_custom_call.1} parent=11 // pred_check
          %p339 = pneg %p219
        $region42: #{tpu_custom_call.1} parent=11 // pred_check_branch
          %341 = sbr.rel (%p339) target = $region44
        $region43: #{tpu_custom_call.1} parent=11 // pred_region
          _
        $region44: #{tpu_custom_call.1} parent=11 // pred_fallthru
          _
        // Predicated region
        $region45: #{tpu_custom_call.1} parent=11 // pred_check
          %p342 = pneg %p240
        $region46: #{tpu_custom_call.1} parent=11 // pred_check_branch
          %344 = sbr.rel (%p342) target = $region48
        $region47: #{tpu_custom_call.1} parent=11 // pred_region
          %s346 = ssub.s32 512, 512
          %347 = vsyncadd [#allocation9], %s346
          %s348 = sshll.u32 [#allocation8], 4
          %s349 = int_to_ptr.vmem [resolvable:$true] %s348
          %354 = dma.hbm_to_vmem [thread:$0]  %s9, 512, %s349, [#allocation9], 128, 128, 8
        $region48: #{tpu_custom_call.1} parent=11 // pred_fallthru
          _
        // Predicated region
        $region49: #{tpu_custom_call.1} parent=11 // pred_check
          %p355 = pneg %p261
        $region50: #{tpu_custom_call.1} parent=11 // pred_check_branch
          %357 = sbr.rel (%p355) target = $region52
        $region51: #{tpu_custom_call.1} parent=11 // pred_region
          _
        $region52: #{tpu_custom_call.1} parent=11 // pred_fallthru
          _
      $region12: #{tpu_custom_call.1} parent=5 // pred_fallthru
        _
      %p358 = scmp.lt.s32.totalorder %s25, 2
      // Predicated region
      $region53: #{tpu_custom_call.1} parent=5 // pred_check
        %p359 = pneg %p358
      $region54: #{tpu_custom_call.1} parent=5 // pred_check_branch
        %361 = sbr.rel (%p359) target = $region56
      $region55: #{tpu_custom_call.1} parent=5 // pred_region
        // Predicated region
        $region57: #{tpu_custom_call.1} parent=55 // pred_check
          %p362 = pneg %p45
        $region58: #{tpu_custom_call.1} parent=55 // pred_check_branch
          %364 = sbr.rel (%p362) target = $region60
        $region59: #{tpu_custom_call.1} parent=55 // pred_region
          %s365 = sand.u32 %s35, 1
          %s366 = scalar_lea.sflag [#allocation3], %s365
          %s367 = sand.u32 %s35, 1
          %s368 = smul.addr %s367, 8
          %s369 = scalar_lea.vmem [#allocation2], %s368
          %s371 = ssub.s32 128, 128
          %372 = vsyncadd %s366, %s371
          %s373 = smul.addr %s25, 128
          %s374 = scalar_lea.hbm %s0, %s373
          %s376 = sshll.u32 %s369, 4
          %s377 = int_to_ptr.vmem [resolvable:$true] %s376
          %379 = dma.hbm_to_vmem [thread:$0]  %s374, 128, %s377, %s366
        $region60: #{tpu_custom_call.1} parent=55 // pred_fallthru
          _
      $region56: #{tpu_custom_call.1} parent=5 // pred_fallthru
        _
      %p380 = scmp.le.s32.totalorder 1, %s25
      %p381 = scmp.lt.s32.totalorder %s25, 3
      %p382 = pnand %p380, %p381
      %p383 = pneg %p382
      // Predicated region
      $region61: #{tpu_custom_call.1} parent=5 // pred_check
        _
      $region62: #{tpu_custom_call.1} parent=5 // pred_check_branch
        %385 = sbr.rel (%p382) target = $region64
      $region63: #{tpu_custom_call.1} parent=5 // pred_region
        %s386 = ssub.s32 %s25, 1
        %s387 = sand.u32 %s38, 1
        %s388 = scalar_lea.sflag [#allocation3], %s387
        %s389 = sand.u32 %s38, 1
        %s390 = smul.addr %s389, 8
        %s391 = scalar_lea.vmem [#allocation2], %s390
        // Predicated region
        $region65: #{tpu_custom_call.1} parent=63 // pred_check
          %p392 = pneg %p51
        $region66: #{tpu_custom_call.1} parent=63 // pred_check_branch
          %394 = sbr.rel (%p392) target = $region68
        $region67: #{tpu_custom_call.1} parent=63 // pred_region
          %395 = dma.done %s388, 128
        $region68: #{tpu_custom_call.1} parent=63 // pred_fallthru
          _
        // Predicated region
        $region69: #{tpu_custom_call.1} parent=63 // pred_check
          %p396 = pneg %p114
        $region70: #{tpu_custom_call.1} parent=63 // pred_check_branch
          %398 = sbr.rel (%p396) target = $region72
        $region71: #{tpu_custom_call.1} parent=63 // pred_region
          %399 = dma.done [#allocation6], 16
        $region72: #{tpu_custom_call.1} parent=63 // pred_fallthru
          _
        // Predicated region
        $region73: #{tpu_custom_call.1} parent=63 // pred_check
          %p400 = pneg %p177
        $region74: #{tpu_custom_call.1} parent=63 // pred_check_branch
          %402 = sbr.rel (%p400) target = $region76
        $region75: #{tpu_custom_call.1} parent=63 // pred_region
          %403 = dma.done [#allocation6], 128
        $region76: #{tpu_custom_call.1} parent=63 // pred_fallthru
          _
        // Predicated region
        $region77: #{tpu_custom_call.1} parent=63 // pred_check
          %p404 = pneg %p240
        $region78: #{tpu_custom_call.1} parent=63 // pred_check_branch
          %406 = sbr.rel (%p404) target = $region80
        $region79: #{tpu_custom_call.1} parent=63 // pred_region
          %407 = dma.done [#allocation9], 512
        $region80: #{tpu_custom_call.1} parent=63 // pred_fallthru
          _
        %s408 = sand.u32 %s38, 1
        %s409 = scalar_lea.sflag [#allocation3], %s408
        %s410 = sand.u32 %s38, 1
        %s411 = smul.addr %s410, 8
        %s412 = scalar_lea.vmem [#allocation2], %s411
        %p413 = pneg %p51
        %p414 = pneg %p48
        %p415 = pneg %p72
        %p416 = pneg %p69
        %p417 = pneg %p93
        %p418 = pneg %p90
        %p419 = pneg %p114
        %p420 = pneg %p111
        %p421 = pneg %p135
        %p422 = pneg %p132
        %p423 = pneg %p156
        %p424 = pneg %p153
        %p425 = pneg %p177
        %p426 = pneg %p174
        %p427 = pneg %p198
        %p428 = pneg %p195
        %p429 = pneg %p219
        %p430 = pneg %p216
        %p431 = pneg %p240
        %p432 = pneg %p237
        %p433 = pneg %p261
        %p434 = pneg %p258
        %p435 = pneg %p287
        %p436 = pneg %p284
        %s437 = sand.u32 %s274, 1
        %s438 = scalar_lea.sflag [#allocation4], %s437
        %s439 = sand.u32 %s274, 1
        %s440 = smul.addr %s439, 8
        %s441 = scalar_lea.vmem [#allocation10], %s440
        %v442 = vld [vmem:[%s391] sm:$0xff]
        %v443 = vmul.f32 %v442, %v442
        %vm444 = vcmask 261120
        %v445 = vsel %vm444, %v443, 0.0
        %446 = vadd.xlane.f32.xlu0 %v445
        %v447 = vpop.xlane.xlu0 %446
        %v448 = vrcp.pop 32.0
        %v449 = vmul.f32 %v447, %v448
        %v450 = vadd.f32 %v449, 1e-06
        %v451 = vrsqrt.pop %v450
        %v452 = vmul.f32 %v442, %v451
        %v453 = vld [vmem:[%s1] sm:$0x1]
        %v455 = vlaneseq
        %v456 = vshrl.u32 %v455, 7
        %v457 = vsub.s32 0, %v456
        %v458 = vrot.slane %v453, %v457
        %v460 = vmul.f32 %v452, %v458
        %v461 = vld [vmem:[%s2] sm:$0xff]
        %v462 = vld [vmem:[%s2 + $0x8] sm:$0xff]
        %v463 = vld [vmem:[%s2 + $0x10] sm:$0xff]
        %v464 = vld [vmem:[%s2 + $0x18] sm:$0xff]
        %v465 = vld [vmem:[#allocation5] sm:$0x1]
        %v467 = vlaneseq
        %v468 = vshrl.u32 %v467, 7
        %v469 = vsub.s32 0, %v468
        %v470 = vrot.slane %v465, %v469
        %v473 = vsel %vm444, %v460, 0
        %475 = vmatprep.subr.mxu0 0.0
        %476 = vmatpush1.msra.mxu0 0.0
        %477 = vmatprep.subr.mxu0 0.0
        %478 = vmatpush1.msra.mxu0 0.0
        %479 = vmatprep.subr.mxu0 0.0
        %480 = vmatpush1.msra.mxu0 0.0
        %481 = vmatprep.subr.mxu0 0.0
        %482 = vmatpush1.msra.mxu0 0.0
        %483 = vmatprep.subr.mxu0 0.0
        %484 = vmatpush1.msra.mxu0 0.0
        %485 = vmatprep.subr.mxu0 0.0
        %486 = vmatpush1.msra.mxu0 0.0
        %487 = vmatprep.subr.mxu0 0.0
        %488 = vmatpush1.msra.mxu0 0.0
        %489 = vmatprep.subr.mxu0 0.0
        %490 = vmatpush1.msra.mxu0 0.0
        %491 = vmatprep.subr.mxu0 0.0
        %492 = vmatpush1.msra.mxu0 0.0
        %493 = vmatprep.subr.mxu0 0.0
        %494 = vmatpush1.msra.mxu0 0.0
        %495 = vmatprep.subr.mxu0 0.0
        %496 = vmatpush1.msra.mxu0 0.0
        %497 = vmatprep.subr.mxu0 0.0
        %498 = vmatpush1.msra.mxu0 0.0
        %499 = vmatprep.subr.mxu0 0.0
        %500 = vmatpush1.msra.mxu0 %v464
        %501 = vmatprep.subr.mxu0 0.0
        %502 = vmatpush1.msra.mxu0 %v463
        %503 = vmatprep.subr.mxu0 0.0
        %504 = vmatpush1.msra.mxu0 %v462
        %505 = vmatprep.subr.mxu0 0.0
        %506 = vmatpush1.msra.mxu0 %v461
        %507 = vmatprep.subr.mxu0 0.0
        %508 = vmatpush2.msra.mxu0 0.0
        %509 = vmatprep.subr.mxu0 0.0
        %510 = vmatpush2.msra.mxu0 0.0
        %511 = vmatprep.subr.mxu0 0.0
        %512 = vmatpush2.msra.mxu0 0.0
        %513 = vmatprep.subr.mxu0 0.0
        %514 = vmatpush2.msra.mxu0 0.0
        %515 = vmatprep.subr.mxu0 0.0
        %516 = vmatpush2.msra.mxu0 0.0
        %517 = vmatprep.subr.mxu0 0.0
        %518 = vmatpush2.msra.mxu0 0.0
        %519 = vmatprep.subr.mxu0 0.0
        %520 = vmatpush2.msra.mxu0 0.0
        %521 = vmatprep.subr.mxu0 0.0
        %522 = vmatpush2.msra.mxu0 0.0
        %523 = vmatprep.subr.mxu0 0.0
        %524 = vmatpush2.msra.mxu0 0.0
        %525 = vmatprep.subr.mxu0 0.0
        %526 = vmatpush2.msra.mxu0 0.0
        %527 = vmatprep.subr.mxu0 0.0
        %528 = vmatpush2.msra.mxu0 0.0
        %529 = vmatprep.subr.mxu0 0.0
        %530 = vmatpush2.msra.mxu0 0.0
        %531 = vmatprep.subr.mxu0 0.0
        %532 = vmatpush2.msra.mxu0 0.0
        %533 = vmatprep.subr.mxu0 0.0
        %534 = vmatpush2.msra.mxu0 0.0
        %535 = vmatprep.subr.mxu0 0.0
        %536 = vmatpush2.msra.mxu0 0.0
        %537 = vmatprep.subr.mxu0 0.0
        %538 = vmatpush2.msra.mxu0 0.0
        %539 = vmatprep.mubr.f32.mxu0 0.0
        %540 = vmatmul.mubr.f32.gmra.mxu0 %v473
        %v541 = vpop.f32.mrf.mxu0
        %v542 = vadd.f32 %v470, %v541
        %v543 = vpop.f32.mrf.mxu0
        %544 = vdwg.mxu0
        %v545 = vld [vmem:[%s5] sm:$0xff]
        %v546 = vld [vmem:[#allocation7] sm:$0xff]
        %v547 = vld [vmem:[%s4] sm:$0xff]
        %v548 = vld [vmem:[%s4 + $0x8] sm:$0xff]
        %v549 = vld [vmem:[%s4 + $0x10] sm:$0xff]
        %v550 = vld [vmem:[%s4 + $0x18] sm:$0xff]
        %v551 = vmul.f32 %v542, %v545
        %v553 = vsel %vm444, %v542, 0
        %555 = vmatprep.subr.mxu0 0.0
        %556 = vmatpush1.msra.mxu0 0.0
        %557 = vmatprep.subr.mxu0 0.0
        %558 = vmatpush1.msra.mxu0 0.0
        %559 = vmatprep.subr.mxu0 0.0
        %560 = vmatpush1.msra.mxu0 0.0
        %561 = vmatprep.subr.mxu0 0.0
        %562 = vmatpush1.msra.mxu0 0.0
        %563 = vmatprep.subr.mxu0 0.0
        %564 = vmatpush1.msra.mxu0 0.0
        %565 = vmatprep.subr.mxu0 0.0
        %566 = vmatpush1.msra.mxu0 0.0
        %567 = vmatprep.subr.mxu0 0.0
        %568 = vmatpush1.msra.mxu0 0.0
        %569 = vmatprep.subr.mxu0 0.0
        %570 = vmatpush1.msra.mxu0 0.0
        %571 = vmatprep.subr.mxu0 0.0
        %572 = vmatpush1.msra.mxu0 0.0
        %573 = vmatprep.subr.mxu0 0.0
        %574 = vmatpush1.msra.mxu0 0.0
        %575 = vmatprep.subr.mxu0 0.0
        %576 = vmatpush1.msra.mxu0 0.0
        %577 = vmatprep.subr.mxu0 0.0
        %578 = vmatpush1.msra.mxu0 0.0
        %579 = vmatprep.subr.mxu0 0.0
        %580 = vmatpush1.msra.mxu0 %v550
        %581 = vmatprep.subr.mxu0 0.0
        %582 = vmatpush1.msra.mxu0 %v549
        %583 = vmatprep.subr.mxu0 0.0
        %584 = vmatpush1.msra.mxu0 %v548
        %585 = vmatprep.subr.mxu0 0.0
        %586 = vmatpush1.msra.mxu0 %v547
        %587 = vmatprep.subr.mxu0 0.0
        %588 = vmatpush2.msra.mxu0 0.0
        %589 = vmatprep.subr.mxu0 0.0
        %590 = vmatpush2.msra.mxu0 0.0
        %591 = vmatprep.subr.mxu0 0.0
        %592 = vmatpush2.msra.mxu0 0.0
        %593 = vmatprep.subr.mxu0 0.0
        %594 = vmatpush2.msra.mxu0 0.0
        %595 = vmatprep.subr.mxu0 0.0
        %596 = vmatpush2.msra.mxu0 0.0
        %597 = vmatprep.subr.mxu0 0.0
        %598 = vmatpush2.msra.mxu0 0.0
        %599 = vmatprep.subr.mxu0 0.0
        %600 = vmatpush2.msra.mxu0 0.0
        %601 = vmatprep.subr.mxu0 0.0
        %602 = vmatpush2.msra.mxu0 0.0
        %603 = vmatprep.subr.mxu0 0.0
        %604 = vmatpush2.msra.mxu0 0.0
        %605 = vmatprep.subr.mxu0 0.0
        %606 = vmatpush2.msra.mxu0 0.0
        %607 = vmatprep.subr.mxu0 0.0
        %608 = vmatpush2.msra.mxu0 0.0
        %609 = vmatprep.subr.mxu0 0.0
        %610 = vmatpush2.msra.mxu0 0.0
        %611 = vmatprep.subr.mxu0 0.0
        %612 = vmatpush2.msra.mxu0 0.0
        %613 = vmatprep.subr.mxu0 0.0
        %614 = vmatpush2.msra.mxu0 0.0
        %615 = vmatprep.subr.mxu0 0.0
        %616 = vmatpush2.msra.mxu0 0.0
        %617 = vmatprep.subr.mxu0 0.0
        %618 = vmatpush2.msra.mxu0 0.0
        %619 = vmatprep.mubr.f32.mxu0 0.0
        %620 = vmatmul.mubr.f32.gmra.mxu0 %v553
        %v621 = vpop.f32.mrf.mxu0
        %v622 = vadd.f32 0.0, %v621
        %v623 = vpop.f32.mrf.mxu0
        %624 = vdwg.mxu0
        %v625 = vmul.f32 %v622, %v546
        %v626 = vadd.f32 %v551, %v625
        %628 = vrot.lane.b32.xlu0 %v545, 32
        %v629 = vpop.permute.xlu0 %628
        %v631 = vmul.f32 %v542, %v629
        %632 = vrot.lane.b32.xlu0 %v542, 96
        %v633 = vpop.permute.xlu0 %632
        %vm634 = vcmask 130048
        %v635 = vsel %vm634, %v633, 0
        %637 = vmatprep.subr.mxu0 0.0
        %638 = vmatpush1.msra.mxu0 0.0
        %639 = vmatprep.subr.mxu0 0.0
        %640 = vmatpush1.msra.mxu0 0.0
        %641 = vmatprep.subr.mxu0 0.0
        %642 = vmatpush1.msra.mxu0 0.0
        %643 = vmatprep.subr.mxu0 0.0
        %644 = vmatpush1.msra.mxu0 0.0
        %645 = vmatprep.subr.mxu0 0.0
        %646 = vmatpush1.msra.mxu0 0.0
        %647 = vmatprep.subr.mxu0 0.0
        %648 = vmatpush1.msra.mxu0 0.0
        %649 = vmatprep.subr.mxu0 0.0
        %650 = vmatpush1.msra.mxu0 0.0
        %651 = vmatprep.subr.mxu0 0.0
        %652 = vmatpush1.msra.mxu0 0.0
        %653 = vmatprep.subr.mxu0 0.0
        %654 = vmatpush1.msra.mxu0 0.0
        %655 = vmatprep.subr.mxu0 0.0
        %656 = vmatpush1.msra.mxu0 0.0
        %657 = vmatprep.subr.mxu0 0.0
        %658 = vmatpush1.msra.mxu0 0.0
        %659 = vmatprep.subr.mxu0 0.0
        %660 = vmatpush1.msra.mxu0 0.0
        %661 = vmatprep.subr.mxu0 0.0
        %662 = vmatpush1.msra.mxu0 0.0
        %663 = vmatprep.subr.mxu0 0.0
        %664 = vmatpush1.msra.mxu0 0.0
        %665 = vmatprep.subr.mxu0 0.0
        %666 = vmatpush1.msra.mxu0 %v548
        %667 = vmatprep.subr.mxu0 0.0
        %668 = vmatpush1.msra.mxu0 %v547
        %669 = vmatprep.subr.mxu0 0.0
        %670 = vmatpush2.msra.mxu0 0.0
        %671 = vmatprep.subr.mxu0 0.0
        %672 = vmatpush2.msra.mxu0 0.0
        %673 = vmatprep.subr.mxu0 0.0
        %674 = vmatpush2.msra.mxu0 0.0
        %675 = vmatprep.subr.mxu0 0.0
        %676 = vmatpush2.msra.mxu0 0.0
        %677 = vmatprep.subr.mxu0 0.0
        %678 = vmatpush2.msra.mxu0 0.0
        %679 = vmatprep.subr.mxu0 0.0
        %680 = vmatpush2.msra.mxu0 0.0
        %681 = vmatprep.subr.mxu0 0.0
        %682 = vmatpush2.msra.mxu0 0.0
        %683 = vmatprep.subr.mxu0 0.0
        %684 = vmatpush2.msra.mxu0 0.0
        %685 = vmatprep.subr.mxu0 0.0
        %686 = vmatpush2.msra.mxu0 0.0
        %687 = vmatprep.subr.mxu0 0.0
        %688 = vmatpush2.msra.mxu0 0.0
        %689 = vmatprep.subr.mxu0 0.0
        %690 = vmatpush2.msra.mxu0 0.0
        %691 = vmatprep.subr.mxu0 0.0
        %692 = vmatpush2.msra.mxu0 0.0
        %693 = vmatprep.subr.mxu0 0.0
        %694 = vmatpush2.msra.mxu0 0.0
        %695 = vmatprep.subr.mxu0 0.0
        %696 = vmatpush2.msra.mxu0 0.0
        %697 = vmatprep.subr.mxu0 0.0
        %698 = vmatpush2.msra.mxu0 0.0
        %699 = vmatprep.subr.mxu0 0.0
        %700 = vmatpush2.msra.mxu0 0.0
        %701 = vmatprep.mubr.f32.mxu0 0.0
        %702 = vmatmul.mubr.f32.gmra.mxu0 %v635
        %v703 = vpop.f32.mrf.mxu0
        %v704 = vadd.f32 0.0, %v703
        %v705 = vpop.f32.mrf.mxu0
        %706 = vdwg.mxu0
        %v707 = vmul.f32 %v704, %v546
        %709 = vrot.lane.b32.xlu0 %v707, 32
        %v710 = vpop.permute.xlu0 %709
        %v712 = vadd.f32 %v631, %v710
        %v713 = vlaneseq
        %v714 = vshrl.u32 %v713, 7
        %v715 = vlaneseq
        %v716 = vand.u32 %v715, 127
        %vm717 = vcmp.le.s32.totalorder %v716, %v714
        %v718 = vld [vmem:[%s7] sm:$0xff]
        %v719 = vld [vmem:[%s7 + $0x8] sm:$0xff]
        %v720 = vld [vmem:[%s7 + $0x10] sm:$0xff]
        %v721 = vld [vmem:[%s7 + $0x18] sm:$0xff]
        %723 = vrot.lane.b32.xlu0 %v712, 96
        %v724 = vpop.permute.xlu0 %723
        %vm725 = vcmask 64512
        %v727 = vsel %vm725, %v626, 0
        %v729 = vsel %vm725, %v724, 0
        %731 = vmatprep.subr.mxu0 0.0
        %732 = vmatpush1.xpose.msra.mxu0 0.0
        %733 = vmatprep.subr.mxu0 0.0
        %734 = vmatpush1.xpose.msra.mxu0 0.0
        %735 = vmatprep.subr.mxu0 0.0
        %736 = vmatpush1.xpose.msra.mxu0 0.0
        %737 = vmatprep.subr.mxu0 0.0
        %738 = vmatpush1.xpose.msra.mxu0 0.0
        %739 = vmatprep.subr.mxu0 0.0
        %740 = vmatpush1.xpose.msra.mxu0 0.0
        %741 = vmatprep.subr.mxu0 0.0
        %742 = vmatpush1.xpose.msra.mxu0 0.0
        %743 = vmatprep.subr.mxu0 0.0
        %744 = vmatpush1.xpose.msra.mxu0 0.0
        %745 = vmatprep.subr.mxu0 0.0
        %746 = vmatpush1.xpose.msra.mxu0 0.0
        %747 = vmatprep.subr.mxu0 0.0
        %748 = vmatpush1.xpose.msra.mxu0 0.0
        %749 = vmatprep.subr.mxu0 0.0
        %750 = vmatpush1.xpose.msra.mxu0 0.0
        %751 = vmatprep.subr.mxu0 0.0
        %752 = vmatpush1.xpose.msra.mxu0 0.0
        %753 = vmatprep.subr.mxu0 0.0
        %754 = vmatpush1.xpose.msra.mxu0 0.0
        %755 = vmatprep.subr.mxu0 0.0
        %756 = vmatpush1.xpose.msra.mxu0 0.0
        %757 = vmatprep.subr.mxu0 0.0
        %758 = vmatpush1.xpose.msra.mxu0 0.0
        %759 = vmatprep.subr.mxu0 0.0
        %760 = vmatpush1.xpose.msra.mxu0 0.0
        %761 = vmatprep.subr.mxu0 0.0
        %762 = vmatpush1.xpose.msra.mxu0 %v729
        %763 = vmatprep.subr.mxu0 0.0
        %764 = vmatpush2.xpose.msra.mxu0 0.0
        %765 = vmatprep.subr.mxu0 0.0
        %766 = vmatpush2.xpose.msra.mxu0 0.0
        %767 = vmatprep.subr.mxu0 0.0
        %768 = vmatpush2.xpose.msra.mxu0 0.0
        %769 = vmatprep.subr.mxu0 0.0
        %770 = vmatpush2.xpose.msra.mxu0 0.0
        %771 = vmatprep.subr.mxu0 0.0
        %772 = vmatpush2.xpose.msra.mxu0 0.0
        %773 = vmatprep.subr.mxu0 0.0
        %774 = vmatpush2.xpose.msra.mxu0 0.0
        %775 = vmatprep.subr.mxu0 0.0
        %776 = vmatpush2.xpose.msra.mxu0 0.0
        %777 = vmatprep.subr.mxu0 0.0
        %778 = vmatpush2.xpose.msra.mxu0 0.0
        %779 = vmatprep.subr.mxu0 0.0
        %780 = vmatpush2.xpose.msra.mxu0 0.0
        %781 = vmatprep.subr.mxu0 0.0
        %782 = vmatpush2.xpose.msra.mxu0 0.0
        %783 = vmatprep.subr.mxu0 0.0
        %784 = vmatpush2.xpose.msra.mxu0 0.0
        %785 = vmatprep.subr.mxu0 0.0
        %786 = vmatpush2.xpose.msra.mxu0 0.0
        %787 = vmatprep.subr.mxu0 0.0
        %788 = vmatpush2.xpose.msra.mxu0 0.0
        %789 = vmatprep.subr.mxu0 0.0
        %790 = vmatpush2.xpose.msra.mxu0 0.0
        %791 = vmatprep.subr.mxu0 0.0
        %792 = vmatpush2.xpose.msra.mxu0 0.0
        %793 = vmatprep.subr.mxu0 0.0
        %794 = vmatpush2.xpose.msra.mxu0 0.0
        %795 = vmatprep.mubr.f32.mxu0 0.0
        %796 = vmatmul.mubr.f32.gmra.mxu0 %v727
        %v797 = vpop.f32.mrf.mxu0
        %v798 = vadd.f32 0.0, %v797
        %v799 = vpop.f32.mrf.mxu0
        %800 = vdwg.mxu0
        %v801 = vmul.f32 %v798, 0.35355338
        %v802 = vsel %vm717, %v801, -1e+30
        %v803 = vsel %vm725, %v802, -inf
        %804 = vmax.xlane.f32.xlu0 %v803
        %v805 = vpop.xlane.xlu0 %804
        %v806 = vsub.f32 %v802, %v805
        %v807 = vmul.f32 %v806, 1.442695
        %v808 = vpow.pop %v807
        %v809 = vsel %vm725, %v808, 0.0
        %810 = vadd.xlane.f32.xlu0 %v809
        %v811 = vpop.xlane.xlu0 %810
        %v812 = vrcp.pop %v811
        %v813 = vmul.f32 %v808, %v812
        %814 = vrot.lane.b32.xlu0 %v542, 80
        %v815 = vpop.permute.xlu0 %814
        %v818 = vsel %vm725, %v813, 0
        %820 = vmatprep.subr.mxu0 0.0
        %821 = vmatpush1.msra.mxu0 0.0
        %822 = vmatprep.subr.mxu0 0.0
        %823 = vmatpush1.msra.mxu0 0.0
        %824 = vmatprep.subr.mxu0 0.0
        %825 = vmatpush1.msra.mxu0 0.0
        %826 = vmatprep.subr.mxu0 0.0
        %827 = vmatpush1.msra.mxu0 0.0
        %828 = vmatprep.subr.mxu0 0.0
        %829 = vmatpush1.msra.mxu0 0.0
        %830 = vmatprep.subr.mxu0 0.0
        %831 = vmatpush1.msra.mxu0 0.0
        %832 = vmatprep.subr.mxu0 0.0
        %833 = vmatpush1.msra.mxu0 0.0
        %834 = vmatprep.subr.mxu0 0.0
        %835 = vmatpush1.msra.mxu0 0.0
        %836 = vmatprep.subr.mxu0 0.0
        %837 = vmatpush1.msra.mxu0 0.0
        %838 = vmatprep.subr.mxu0 0.0
        %839 = vmatpush1.msra.mxu0 0.0
        %840 = vmatprep.subr.mxu0 0.0
        %841 = vmatpush1.msra.mxu0 0.0
        %842 = vmatprep.subr.mxu0 0.0
        %843 = vmatpush1.msra.mxu0 0.0
        %844 = vmatprep.subr.mxu0 0.0
        %845 = vmatpush1.msra.mxu0 0.0
        %846 = vmatprep.subr.mxu0 0.0
        %847 = vmatpush1.msra.mxu0 0.0
        %848 = vmatprep.subr.mxu0 0.0
        %849 = vmatpush1.msra.mxu0 0.0
        %850 = vmatprep.subr.mxu0 0.0
        %851 = vmatpush1.msra.mxu0 %v815
        %852 = vmatprep.subr.mxu0 0.0
        %853 = vmatpush2.msra.mxu0 0.0
        %854 = vmatprep.subr.mxu0 0.0
        %855 = vmatpush2.msra.mxu0 0.0
        %856 = vmatprep.subr.mxu0 0.0
        %857 = vmatpush2.msra.mxu0 0.0
        %858 = vmatprep.subr.mxu0 0.0
        %859 = vmatpush2.msra.mxu0 0.0
        %860 = vmatprep.subr.mxu0 0.0
        %861 = vmatpush2.msra.mxu0 0.0
        %862 = vmatprep.subr.mxu0 0.0
        %863 = vmatpush2.msra.mxu0 0.0
        %864 = vmatprep.subr.mxu0 0.0
        %865 = vmatpush2.msra.mxu0 0.0
        %866 = vmatprep.subr.mxu0 0.0
        %867 = vmatpush2.msra.mxu0 0.0
        %868 = vmatprep.subr.mxu0 0.0
        %869 = vmatpush2.msra.mxu0 0.0
        %870 = vmatprep.subr.mxu0 0.0
        %871 = vmatpush2.msra.mxu0 0.0
        %872 = vmatprep.subr.mxu0 0.0
        %873 = vmatpush2.msra.mxu0 0.0
        %874 = vmatprep.subr.mxu0 0.0
        %875 = vmatpush2.msra.mxu0 0.0
        %876 = vmatprep.subr.mxu0 0.0
        %877 = vmatpush2.msra.mxu0 0.0
        %878 = vmatprep.subr.mxu0 0.0
        %879 = vmatpush2.msra.mxu0 0.0
        %880 = vmatprep.subr.mxu0 0.0
        %881 = vmatpush2.msra.mxu0 0.0
        %882 = vmatprep.subr.mxu0 0.0
        %883 = vmatpush2.msra.mxu0 0.0
        %884 = vmatprep.mubr.f32.mxu0 0.0
        %885 = vmatmul.mubr.f32.gmra.mxu0 %v818
        %v886 = vpop.f32.mrf.mxu0
        %v887 = vadd.f32 0.0, %v886
        %v888 = vpop.f32.mrf.mxu0
        %889 = vdwg.mxu0
        %890 = vrot.lane.b32.xlu0 %v626, 120
        %v891 = vpop.permute.xlu0 %890
        %v892 = vsel %vm725, %v891, 0
        %894 = vmatprep.subr.mxu0 0.0
        %895 = vmatpush1.xpose.msra.mxu0 0.0
        %896 = vmatprep.subr.mxu0 0.0
        %897 = vmatpush1.xpose.msra.mxu0 0.0
        %898 = vmatprep.subr.mxu0 0.0
        %899 = vmatpush1.xpose.msra.mxu0 0.0
        %900 = vmatprep.subr.mxu0 0.0
        %901 = vmatpush1.xpose.msra.mxu0 0.0
        %902 = vmatprep.subr.mxu0 0.0
        %903 = vmatpush1.xpose.msra.mxu0 0.0
        %904 = vmatprep.subr.mxu0 0.0
        %905 = vmatpush1.xpose.msra.mxu0 0.0
        %906 = vmatprep.subr.mxu0 0.0
        %907 = vmatpush1.xpose.msra.mxu0 0.0
        %908 = vmatprep.subr.mxu0 0.0
        %909 = vmatpush1.xpose.msra.mxu0 0.0
        %910 = vmatprep.subr.mxu0 0.0
        %911 = vmatpush1.xpose.msra.mxu0 0.0
        %912 = vmatprep.subr.mxu0 0.0
        %913 = vmatpush1.xpose.msra.mxu0 0.0
        %914 = vmatprep.subr.mxu0 0.0
        %915 = vmatpush1.xpose.msra.mxu0 0.0
        %916 = vmatprep.subr.mxu0 0.0
        %917 = vmatpush1.xpose.msra.mxu0 0.0
        %918 = vmatprep.subr.mxu0 0.0
        %919 = vmatpush1.xpose.msra.mxu0 0.0
        %920 = vmatprep.subr.mxu0 0.0
        %921 = vmatpush1.xpose.msra.mxu0 0.0
        %922 = vmatprep.subr.mxu0 0.0
        %923 = vmatpush1.xpose.msra.mxu0 0.0
        %924 = vmatprep.subr.mxu0 0.0
        %925 = vmatpush1.xpose.msra.mxu0 %v729
        %926 = vmatprep.subr.mxu0 0.0
        %927 = vmatpush2.xpose.msra.mxu0 0.0
        %928 = vmatprep.subr.mxu0 0.0
        %929 = vmatpush2.xpose.msra.mxu0 0.0
        %930 = vmatprep.subr.mxu0 0.0
        %931 = vmatpush2.xpose.msra.mxu0 0.0
        %932 = vmatprep.subr.mxu0 0.0
        %933 = vmatpush2.xpose.msra.mxu0 0.0
        %934 = vmatprep.subr.mxu0 0.0
        %935 = vmatpush2.xpose.msra.mxu0 0.0
        %936 = vmatprep.subr.mxu0 0.0
        %937 = vmatpush2.xpose.msra.mxu0 0.0
        %938 = vmatprep.subr.mxu0 0.0
        %939 = vmatpush2.xpose.msra.mxu0 0.0
        %940 = vmatprep.subr.mxu0 0.0
        %941 = vmatpush2.xpose.msra.mxu0 0.0
        %942 = vmatprep.subr.mxu0 0.0
        %943 = vmatpush2.xpose.msra.mxu0 0.0
        %944 = vmatprep.subr.mxu0 0.0
        %945 = vmatpush2.xpose.msra.mxu0 0.0
        %946 = vmatprep.subr.mxu0 0.0
        %947 = vmatpush2.xpose.msra.mxu0 0.0
        %948 = vmatprep.subr.mxu0 0.0
        %949 = vmatpush2.xpose.msra.mxu0 0.0
        %950 = vmatprep.subr.mxu0 0.0
        %951 = vmatpush2.xpose.msra.mxu0 0.0
        %952 = vmatprep.subr.mxu0 0.0
        %953 = vmatpush2.xpose.msra.mxu0 0.0
        %954 = vmatprep.subr.mxu0 0.0
        %955 = vmatpush2.xpose.msra.mxu0 0.0
        %956 = vmatprep.subr.mxu0 0.0
        %957 = vmatpush2.xpose.msra.mxu0 0.0
        %958 = vmatprep.mubr.f32.mxu0 0.0
        %959 = vmatmul.mubr.f32.gmra.mxu0 %v892
        %v960 = vpop.f32.mrf.mxu0
        %v961 = vadd.f32 0.0, %v960
        %v962 = vpop.f32.mrf.mxu0
        %963 = vdwg.mxu0
        %v964 = vmul.f32 %v961, 0.35355338
        %v965 = vsel %vm717, %v964, -1e+30
        %v966 = vsel %vm725, %v965, -inf
        %967 = vmax.xlane.f32.xlu0 %v966
        %v968 = vpop.xlane.xlu0 %967
        %v969 = vsub.f32 %v965, %v968
        %v970 = vmul.f32 %v969, 1.442695
        %v971 = vpow.pop %v970
        %v972 = vsel %vm725, %v971, 0.0
        %973 = vadd.xlane.f32.xlu0 %v972
        %v974 = vpop.xlane.xlu0 %973
        %v975 = vrcp.pop %v974
        %v976 = vmul.f32 %v971, %v975
        %v978 = vsel %vm725, %v976, 0
        %980 = vmatprep.subr.mxu0 0.0
        %981 = vmatpush1.msra.mxu0 0.0
        %982 = vmatprep.subr.mxu0 0.0
        %983 = vmatpush1.msra.mxu0 0.0
        %984 = vmatprep.subr.mxu0 0.0
        %985 = vmatpush1.msra.mxu0 0.0
        %986 = vmatprep.subr.mxu0 0.0
        %987 = vmatpush1.msra.mxu0 0.0
        %988 = vmatprep.subr.mxu0 0.0
        %989 = vmatpush1.msra.mxu0 0.0
        %990 = vmatprep.subr.mxu0 0.0
        %991 = vmatpush1.msra.mxu0 0.0
        %992 = vmatprep.subr.mxu0 0.0
        %993 = vmatpush1.msra.mxu0 0.0
        %994 = vmatprep.subr.mxu0 0.0
        %995 = vmatpush1.msra.mxu0 0.0
        %996 = vmatprep.subr.mxu0 0.0
        %997 = vmatpush1.msra.mxu0 0.0
        %998 = vmatprep.subr.mxu0 0.0
        %999 = vmatpush1.msra.mxu0 0.0
        %1000 = vmatprep.subr.mxu0 0.0
        %1001 = vmatpush1.msra.mxu0 0.0
        %1002 = vmatprep.subr.mxu0 0.0
        %1003 = vmatpush1.msra.mxu0 0.0
        %1004 = vmatprep.subr.mxu0 0.0
        %1005 = vmatpush1.msra.mxu0 0.0
        %1006 = vmatprep.subr.mxu0 0.0
        %1007 = vmatpush1.msra.mxu0 0.0
        %1008 = vmatprep.subr.mxu0 0.0
        %1009 = vmatpush1.msra.mxu0 0.0
        %1010 = vmatprep.subr.mxu0 0.0
        %1011 = vmatpush1.msra.mxu0 %v815
        %1012 = vmatprep.subr.mxu0 0.0
        %1013 = vmatpush2.msra.mxu0 0.0
        %1014 = vmatprep.subr.mxu0 0.0
        %1015 = vmatpush2.msra.mxu0 0.0
        %1016 = vmatprep.subr.mxu0 0.0
        %1017 = vmatpush2.msra.mxu0 0.0
        %1018 = vmatprep.subr.mxu0 0.0
        %1019 = vmatpush2.msra.mxu0 0.0
        %1020 = vmatprep.subr.mxu0 0.0
        %1021 = vmatpush2.msra.mxu0 0.0
        %1022 = vmatprep.subr.mxu0 0.0
        %1023 = vmatpush2.msra.mxu0 0.0
        %1024 = vmatprep.subr.mxu0 0.0
        %1025 = vmatpush2.msra.mxu0 0.0
        %1026 = vmatprep.subr.mxu0 0.0
        %1027 = vmatpush2.msra.mxu0 0.0
        %1028 = vmatprep.subr.mxu0 0.0
        %1029 = vmatpush2.msra.mxu0 0.0
        %1030 = vmatprep.subr.mxu0 0.0
        %1031 = vmatpush2.msra.mxu0 0.0
        %1032 = vmatprep.subr.mxu0 0.0
        %1033 = vmatpush2.msra.mxu0 0.0
        %1034 = vmatprep.subr.mxu0 0.0
        %1035 = vmatpush2.msra.mxu0 0.0
        %1036 = vmatprep.subr.mxu0 0.0
        %1037 = vmatpush2.msra.mxu0 0.0
        %1038 = vmatprep.subr.mxu0 0.0
        %1039 = vmatpush2.msra.mxu0 0.0
        %1040 = vmatprep.subr.mxu0 0.0
        %1041 = vmatpush2.msra.mxu0 0.0
        %1042 = vmatprep.subr.mxu0 0.0
        %1043 = vmatpush2.msra.mxu0 0.0
        %1044 = vmatprep.mubr.f32.mxu0 0.0
        %1045 = vmatmul.mubr.f32.gmra.mxu0 %v978
        %v1046 = vpop.f32.mrf.mxu0
        %v1047 = vadd.f32 0.0, %v1046
        %v1048 = vpop.f32.mrf.mxu0
        %1049 = vdwg.mxu0
        %v1051 = vsel %vm725, %v1047, 0
        %1053 = vmatprep.subr.mxu0 0.0
        %1054 = vmatpush1.msra.mxu0 0.0
        %1055 = vmatprep.subr.mxu0 0.0
        %1056 = vmatpush1.msra.mxu0 0.0
        %1057 = vmatprep.subr.mxu0 0.0
        %1058 = vmatpush1.msra.mxu0 0.0
        %1059 = vmatprep.subr.mxu0 0.0
        %1060 = vmatpush1.msra.mxu0 0.0
        %1061 = vmatprep.subr.mxu0 0.0
        %1062 = vmatpush1.msra.mxu0 0.0
        %1063 = vmatprep.subr.mxu0 0.0
        %1064 = vmatpush1.msra.mxu0 0.0
        %1065 = vmatprep.subr.mxu0 0.0
        %1066 = vmatpush1.msra.mxu0 0.0
        %1067 = vmatprep.subr.mxu0 0.0
        %1068 = vmatpush1.msra.mxu0 0.0
        %1069 = vmatprep.subr.mxu0 0.0
        %1070 = vmatpush1.msra.mxu0 0.0
        %1071 = vmatprep.subr.mxu0 0.0
        %1072 = vmatpush1.msra.mxu0 0.0
        %1073 = vmatprep.subr.mxu0 0.0
        %1074 = vmatpush1.msra.mxu0 0.0
        %1075 = vmatprep.subr.mxu0 0.0
        %1076 = vmatpush1.msra.mxu0 0.0
        %1077 = vmatprep.subr.mxu0 0.0
        %1078 = vmatpush1.msra.mxu0 0.0
        %1079 = vmatprep.subr.mxu0 0.0
        %1080 = vmatpush1.msra.mxu0 0.0
        %1081 = vmatprep.subr.mxu0 0.0
        %1082 = vmatpush1.msra.mxu0 0.0
        %1083 = vmatprep.subr.mxu0 0.0
        %1084 = vmatpush1.msra.mxu0 %v719
        %1085 = vmatprep.subr.mxu0 0.0
        %1086 = vmatpush2.msra.mxu0 0.0
        %1087 = vmatprep.subr.mxu0 0.0
        %1088 = vmatpush2.msra.mxu0 0.0
        %1089 = vmatprep.subr.mxu0 0.0
        %1090 = vmatpush2.msra.mxu0 0.0
        %1091 = vmatprep.subr.mxu0 0.0
        %1092 = vmatpush2.msra.mxu0 0.0
        %1093 = vmatprep.subr.mxu0 0.0
        %1094 = vmatpush2.msra.mxu0 0.0
        %1095 = vmatprep.subr.mxu0 0.0
        %1096 = vmatpush2.msra.mxu0 0.0
        %1097 = vmatprep.subr.mxu0 0.0
        %1098 = vmatpush2.msra.mxu0 0.0
        %1099 = vmatprep.subr.mxu0 0.0
        %1100 = vmatpush2.msra.mxu0 0.0
        %1101 = vmatprep.subr.mxu0 0.0
        %1102 = vmatpush2.msra.mxu0 0.0
        %1103 = vmatprep.subr.mxu0 0.0
        %1104 = vmatpush2.msra.mxu0 0.0
        %1105 = vmatprep.subr.mxu0 0.0
        %1106 = vmatpush2.msra.mxu0 0.0
        %1107 = vmatprep.subr.mxu0 0.0
        %1108 = vmatpush2.msra.mxu0 0.0
        %1109 = vmatprep.subr.mxu0 0.0
        %1110 = vmatpush2.msra.mxu0 0.0
        %1111 = vmatprep.subr.mxu0 0.0
        %1112 = vmatpush2.msra.mxu0 0.0
        %1113 = vmatprep.subr.mxu0 0.0
        %1114 = vmatpush2.msra.mxu0 0.0
        %1115 = vmatprep.subr.mxu0 0.0
        %1116 = vmatpush2.msra.mxu0 0.0
        %1117 = vmatprep.mubr.f32.mxu0 0.0
        %1118 = vmatmul.mubr.f32.gmra.mxu0 %v1051
        %v1119 = vpop.f32.mrf.mxu0
        %v1120 = vadd.f32 0.0, %v1119
        %v1121 = vpop.f32.mrf.mxu0
        %1122 = vdwg.mxu0
        %v1124 = vsel %vm725, %v887, 0
        %1126 = vmatprep.subr.mxu0 0.0
        %1127 = vmatpush1.msra.mxu0 0.0
        %1128 = vmatprep.subr.mxu0 0.0
        %1129 = vmatpush1.msra.mxu0 0.0
        %1130 = vmatprep.subr.mxu0 0.0
        %1131 = vmatpush1.msra.mxu0 0.0
        %1132 = vmatprep.subr.mxu0 0.0
        %1133 = vmatpush1.msra.mxu0 0.0
        %1134 = vmatprep.subr.mxu0 0.0
        %1135 = vmatpush1.msra.mxu0 0.0
        %1136 = vmatprep.subr.mxu0 0.0
        %1137 = vmatpush1.msra.mxu0 0.0
        %1138 = vmatprep.subr.mxu0 0.0
        %1139 = vmatpush1.msra.mxu0 0.0
        %1140 = vmatprep.subr.mxu0 0.0
        %1141 = vmatpush1.msra.mxu0 0.0
        %1142 = vmatprep.subr.mxu0 0.0
        %1143 = vmatpush1.msra.mxu0 0.0
        %1144 = vmatprep.subr.mxu0 0.0
        %1145 = vmatpush1.msra.mxu0 0.0
        %1146 = vmatprep.subr.mxu0 0.0
        %1147 = vmatpush1.msra.mxu0 0.0
        %1148 = vmatprep.subr.mxu0 0.0
        %1149 = vmatpush1.msra.mxu0 0.0
        %1150 = vmatprep.subr.mxu0 0.0
        %1151 = vmatpush1.msra.mxu0 0.0
        %1152 = vmatprep.subr.mxu0 0.0
        %1153 = vmatpush1.msra.mxu0 0.0
        %1154 = vmatprep.subr.mxu0 0.0
        %1155 = vmatpush1.msra.mxu0 0.0
        %1156 = vmatprep.subr.mxu0 0.0
        %1157 = vmatpush1.msra.mxu0 %v718
        %1158 = vmatprep.subr.mxu0 0.0
        %1159 = vmatpush2.msra.mxu0 0.0
        %1160 = vmatprep.subr.mxu0 0.0
        %1161 = vmatpush2.msra.mxu0 0.0
        %1162 = vmatprep.subr.mxu0 0.0
        %1163 = vmatpush2.msra.mxu0 0.0
        %1164 = vmatprep.subr.mxu0 0.0
        %1165 = vmatpush2.msra.mxu0 0.0
        %1166 = vmatprep.subr.mxu0 0.0
        %1167 = vmatpush2.msra.mxu0 0.0
        %1168 = vmatprep.subr.mxu0 0.0
        %1169 = vmatpush2.msra.mxu0 0.0
        %1170 = vmatprep.subr.mxu0 0.0
        %1171 = vmatpush2.msra.mxu0 0.0
        %1172 = vmatprep.subr.mxu0 0.0
        %1173 = vmatpush2.msra.mxu0 0.0
        %1174 = vmatprep.subr.mxu0 0.0
        %1175 = vmatpush2.msra.mxu0 0.0
        %1176 = vmatprep.subr.mxu0 0.0
        %1177 = vmatpush2.msra.mxu0 0.0
        %1178 = vmatprep.subr.mxu0 0.0
        %1179 = vmatpush2.msra.mxu0 0.0
        %1180 = vmatprep.subr.mxu0 0.0
        %1181 = vmatpush2.msra.mxu0 0.0
        %1182 = vmatprep.subr.mxu0 0.0
        %1183 = vmatpush2.msra.mxu0 0.0
        %1184 = vmatprep.subr.mxu0 0.0
        %1185 = vmatpush2.msra.mxu0 0.0
        %1186 = vmatprep.subr.mxu0 0.0
        %1187 = vmatpush2.msra.mxu0 0.0
        %1188 = vmatprep.subr.mxu0 0.0
        %1189 = vmatpush2.msra.mxu0 0.0
        %1190 = vmatprep.mubr.f32.mxu0 0.0
        %1191 = vmatmul.mubr.f32.gmra.mxu0 %v1124
        %v1192 = vpop.f32.mrf.mxu0
        %v1193 = vadd.f32 %v1120, %v1192
        %v1194 = vpop.f32.mrf.mxu0
        %1195 = vdwg.mxu0
        %1196 = vrot.lane.b32.xlu0 %v626, 112
        %v1197 = vpop.permute.xlu0 %1196
        %1198 = vrot.lane.b32.xlu0 %v712, 88
        %v1199 = vpop.permute.xlu0 %1198
        %v1200 = vsel %vm725, %v1197, 0
        %v1202 = vsel %vm725, %v1199, 0
        %1204 = vmatprep.subr.mxu0 0.0
        %1205 = vmatpush1.xpose.msra.mxu0 0.0
        %1206 = vmatprep.subr.mxu0 0.0
        %1207 = vmatpush1.xpose.msra.mxu0 0.0
        %1208 = vmatprep.subr.mxu0 0.0
        %1209 = vmatpush1.xpose.msra.mxu0 0.0
        %1210 = vmatprep.subr.mxu0 0.0
        %1211 = vmatpush1.xpose.msra.mxu0 0.0
        %1212 = vmatprep.subr.mxu0 0.0
        %1213 = vmatpush1.xpose.msra.mxu0 0.0
        %1214 = vmatprep.subr.mxu0 0.0
        %1215 = vmatpush1.xpose.msra.mxu0 0.0
        %1216 = vmatprep.subr.mxu0 0.0
        %1217 = vmatpush1.xpose.msra.mxu0 0.0
        %1218 = vmatprep.subr.mxu0 0.0
        %1219 = vmatpush1.xpose.msra.mxu0 0.0
        %1220 = vmatprep.subr.mxu0 0.0
        %1221 = vmatpush1.xpose.msra.mxu0 0.0
        %1222 = vmatprep.subr.mxu0 0.0
        %1223 = vmatpush1.xpose.msra.mxu0 0.0
        %1224 = vmatprep.subr.mxu0 0.0
        %1225 = vmatpush1.xpose.msra.mxu0 0.0
        %1226 = vmatprep.subr.mxu0 0.0
        %1227 = vmatpush1.xpose.msra.mxu0 0.0
        %1228 = vmatprep.subr.mxu0 0.0
        %1229 = vmatpush1.xpose.msra.mxu0 0.0
        %1230 = vmatprep.subr.mxu0 0.0
        %1231 = vmatpush1.xpose.msra.mxu0 0.0
        %1232 = vmatprep.subr.mxu0 0.0
        %1233 = vmatpush1.xpose.msra.mxu0 0.0
        %1234 = vmatprep.subr.mxu0 0.0
        %1235 = vmatpush1.xpose.msra.mxu0 %v1202
        %1236 = vmatprep.subr.mxu0 0.0
        %1237 = vmatpush2.xpose.msra.mxu0 0.0
        %1238 = vmatprep.subr.mxu0 0.0
        %1239 = vmatpush2.xpose.msra.mxu0 0.0
        %1240 = vmatprep.subr.mxu0 0.0
        %1241 = vmatpush2.xpose.msra.mxu0 0.0
        %1242 = vmatprep.subr.mxu0 0.0
        %1243 = vmatpush2.xpose.msra.mxu0 0.0
        %1244 = vmatprep.subr.mxu0 0.0
        %1245 = vmatpush2.xpose.msra.mxu0 0.0
        %1246 = vmatprep.subr.mxu0 0.0
        %1247 = vmatpush2.xpose.msra.mxu0 0.0
        %1248 = vmatprep.subr.mxu0 0.0
        %1249 = vmatpush2.xpose.msra.mxu0 0.0
        %1250 = vmatprep.subr.mxu0 0.0
        %1251 = vmatpush2.xpose.msra.mxu0 0.0
        %1252 = vmatprep.subr.mxu0 0.0
        %1253 = vmatpush2.xpose.msra.mxu0 0.0
        %1254 = vmatprep.subr.mxu0 0.0
        %1255 = vmatpush2.xpose.msra.mxu0 0.0
        %1256 = vmatprep.subr.mxu0 0.0
        %1257 = vmatpush2.xpose.msra.mxu0 0.0
        %1258 = vmatprep.subr.mxu0 0.0
        %1259 = vmatpush2.xpose.msra.mxu0 0.0
        %1260 = vmatprep.subr.mxu0 0.0
        %1261 = vmatpush2.xpose.msra.mxu0 0.0
        %1262 = vmatprep.subr.mxu0 0.0
        %1263 = vmatpush2.xpose.msra.mxu0 0.0
        %1264 = vmatprep.subr.mxu0 0.0
        %1265 = vmatpush2.xpose.msra.mxu0 0.0
        %1266 = vmatprep.subr.mxu0 0.0
        %1267 = vmatpush2.xpose.msra.mxu0 0.0
        %1268 = vmatprep.mubr.f32.mxu0 0.0
        %1269 = vmatmul.mubr.f32.gmra.mxu0 %v1200
        %v1270 = vpop.f32.mrf.mxu0
        %v1271 = vadd.f32 0.0, %v1270
        %v1272 = vpop.f32.mrf.mxu0
        %1273 = vdwg.mxu0
        %v1274 = vmul.f32 %v1271, 0.35355338
        %v1275 = vsel %vm717, %v1274, -1e+30
        %v1276 = vsel %vm725, %v1275, -inf
        %1277 = vmax.xlane.f32.xlu0 %v1276
        %v1278 = vpop.xlane.xlu0 %1277
        %v1279 = vsub.f32 %v1275, %v1278
        %v1280 = vmul.f32 %v1279, 1.442695
        %v1281 = vpow.pop %v1280
        %v1282 = vsel %vm725, %v1281, 0.0
        %1283 = vadd.xlane.f32.xlu0 %v1282
        %v1284 = vpop.xlane.xlu0 %1283
        %v1285 = vrcp.pop %v1284
        %v1286 = vmul.f32 %v1281, %v1285
        %1287 = vrot.lane.b32.xlu0 %v542, 72
        %v1288 = vpop.permute.xlu0 %1287
        %v1291 = vsel %vm725, %v1286, 0
        %1293 = vmatprep.subr.mxu0 0.0
        %1294 = vmatpush1.msra.mxu0 0.0
        %1295 = vmatprep.subr.mxu0 0.0
        %1296 = vmatpush1.msra.mxu0 0.0
        %1297 = vmatprep.subr.mxu0 0.0
        %1298 = vmatpush1.msra.mxu0 0.0
        %1299 = vmatprep.subr.mxu0 0.0
        %1300 = vmatpush1.msra.mxu0 0.0
        %1301 = vmatprep.subr.mxu0 0.0
        %1302 = vmatpush1.msra.mxu0 0.0
        %1303 = vmatprep.subr.mxu0 0.0
        %1304 = vmatpush1.msra.mxu0 0.0
        %1305 = vmatprep.subr.mxu0 0.0
        %1306 = vmatpush1.msra.mxu0 0.0
        %1307 = vmatprep.subr.mxu0 0.0
        %1308 = vmatpush1.msra.mxu0 0.0
        %1309 = vmatprep.subr.mxu0 0.0
        %1310 = vmatpush1.msra.mxu0 0.0
        %1311 = vmatprep.subr.mxu0 0.0
        %1312 = vmatpush1.msra.mxu0 0.0
        %1313 = vmatprep.subr.mxu0 0.0
        %1314 = vmatpush1.msra.mxu0 0.0
        %1315 = vmatprep.subr.mxu0 0.0
        %1316 = vmatpush1.msra.mxu0 0.0
        %1317 = vmatprep.subr.mxu0 0.0
        %1318 = vmatpush1.msra.mxu0 0.0
        %1319 = vmatprep.subr.mxu0 0.0
        %1320 = vmatpush1.msra.mxu0 0.0
        %1321 = vmatprep.subr.mxu0 0.0
        %1322 = vmatpush1.msra.mxu0 0.0
        %1323 = vmatprep.subr.mxu0 0.0
        %1324 = vmatpush1.msra.mxu0 %v1288
        %1325 = vmatprep.subr.mxu0 0.0
        %1326 = vmatpush2.msra.mxu0 0.0
        %1327 = vmatprep.subr.mxu0 0.0
        %1328 = vmatpush2.msra.mxu0 0.0
        %1329 = vmatprep.subr.mxu0 0.0
        %1330 = vmatpush2.msra.mxu0 0.0
        %1331 = vmatprep.subr.mxu0 0.0
        %1332 = vmatpush2.msra.mxu0 0.0
        %1333 = vmatprep.subr.mxu0 0.0
        %1334 = vmatpush2.msra.mxu0 0.0
        %1335 = vmatprep.subr.mxu0 0.0
        %1336 = vmatpush2.msra.mxu0 0.0
        %1337 = vmatprep.subr.mxu0 0.0
        %1338 = vmatpush2.msra.mxu0 0.0
        %1339 = vmatprep.subr.mxu0 0.0
        %1340 = vmatpush2.msra.mxu0 0.0
        %1341 = vmatprep.subr.mxu0 0.0
        %1342 = vmatpush2.msra.mxu0 0.0
        %1343 = vmatprep.subr.mxu0 0.0
        %1344 = vmatpush2.msra.mxu0 0.0
        %1345 = vmatprep.subr.mxu0 0.0
        %1346 = vmatpush2.msra.mxu0 0.0
        %1347 = vmatprep.subr.mxu0 0.0
        %1348 = vmatpush2.msra.mxu0 0.0
        %1349 = vmatprep.subr.mxu0 0.0
        %1350 = vmatpush2.msra.mxu0 0.0
        %1351 = vmatprep.subr.mxu0 0.0
        %1352 = vmatpush2.msra.mxu0 0.0
        %1353 = vmatprep.subr.mxu0 0.0
        %1354 = vmatpush2.msra.mxu0 0.0
        %1355 = vmatprep.subr.mxu0 0.0
        %1356 = vmatpush2.msra.mxu0 0.0
        %1357 = vmatprep.mubr.f32.mxu0 0.0
        %1358 = vmatmul.mubr.f32.gmra.mxu0 %v1291
        %v1359 = vpop.f32.mrf.mxu0
        %v1360 = vadd.f32 0.0, %v1359
        %v1361 = vpop.f32.mrf.mxu0
        %1362 = vdwg.mxu0
        %v1364 = vsel %vm725, %v1360, 0
        %1366 = vmatprep.subr.mxu0 0.0
        %1367 = vmatpush1.msra.mxu0 0.0
        %1368 = vmatprep.subr.mxu0 0.0
        %1369 = vmatpush1.msra.mxu0 0.0
        %1370 = vmatprep.subr.mxu0 0.0
        %1371 = vmatpush1.msra.mxu0 0.0
        %1372 = vmatprep.subr.mxu0 0.0
        %1373 = vmatpush1.msra.mxu0 0.0
        %1374 = vmatprep.subr.mxu0 0.0
        %1375 = vmatpush1.msra.mxu0 0.0
        %1376 = vmatprep.subr.mxu0 0.0
        %1377 = vmatpush1.msra.mxu0 0.0
        %1378 = vmatprep.subr.mxu0 0.0
        %1379 = vmatpush1.msra.mxu0 0.0
        %1380 = vmatprep.subr.mxu0 0.0
        %1381 = vmatpush1.msra.mxu0 0.0
        %1382 = vmatprep.subr.mxu0 0.0
        %1383 = vmatpush1.msra.mxu0 0.0
        %1384 = vmatprep.subr.mxu0 0.0
        %1385 = vmatpush1.msra.mxu0 0.0
        %1386 = vmatprep.subr.mxu0 0.0
        %1387 = vmatpush1.msra.mxu0 0.0
        %1388 = vmatprep.subr.mxu0 0.0
        %1389 = vmatpush1.msra.mxu0 0.0
        %1390 = vmatprep.subr.mxu0 0.0
        %1391 = vmatpush1.msra.mxu0 0.0
        %1392 = vmatprep.subr.mxu0 0.0
        %1393 = vmatpush1.msra.mxu0 0.0
        %1394 = vmatprep.subr.mxu0 0.0
        %1395 = vmatpush1.msra.mxu0 0.0
        %1396 = vmatprep.subr.mxu0 0.0
        %1397 = vmatpush1.msra.mxu0 %v720
        %1398 = vmatprep.subr.mxu0 0.0
        %1399 = vmatpush2.msra.mxu0 0.0
        %1400 = vmatprep.subr.mxu0 0.0
        %1401 = vmatpush2.msra.mxu0 0.0
        %1402 = vmatprep.subr.mxu0 0.0
        %1403 = vmatpush2.msra.mxu0 0.0
        %1404 = vmatprep.subr.mxu0 0.0
        %1405 = vmatpush2.msra.mxu0 0.0
        %1406 = vmatprep.subr.mxu0 0.0
        %1407 = vmatpush2.msra.mxu0 0.0
        %1408 = vmatprep.subr.mxu0 0.0
        %1409 = vmatpush2.msra.mxu0 0.0
        %1410 = vmatprep.subr.mxu0 0.0
        %1411 = vmatpush2.msra.mxu0 0.0
        %1412 = vmatprep.subr.mxu0 0.0
        %1413 = vmatpush2.msra.mxu0 0.0
        %1414 = vmatprep.subr.mxu0 0.0
        %1415 = vmatpush2.msra.mxu0 0.0
        %1416 = vmatprep.subr.mxu0 0.0
        %1417 = vmatpush2.msra.mxu0 0.0
        %1418 = vmatprep.subr.mxu0 0.0
        %1419 = vmatpush2.msra.mxu0 0.0
        %1420 = vmatprep.subr.mxu0 0.0
        %1421 = vmatpush2.msra.mxu0 0.0
        %1422 = vmatprep.subr.mxu0 0.0
        %1423 = vmatpush2.msra.mxu0 0.0
        %1424 = vmatprep.subr.mxu0 0.0
        %1425 = vmatpush2.msra.mxu0 0.0
        %1426 = vmatprep.subr.mxu0 0.0
        %1427 = vmatpush2.msra.mxu0 0.0
        %1428 = vmatprep.subr.mxu0 0.0
        %1429 = vmatpush2.msra.mxu0 0.0
        %1430 = vmatprep.mubr.f32.mxu0 0.0
        %1431 = vmatmul.mubr.f32.gmra.mxu0 %v1364
        %v1432 = vpop.f32.mrf.mxu0
        %v1433 = vadd.f32 0.0, %v1432
        %v1434 = vpop.f32.mrf.mxu0
        %1435 = vdwg.mxu0
        %v1436 = vadd.f32 %v1193, %v1433
        %1437 = vrot.lane.b32.xlu0 %v626, 104
        %v1438 = vpop.permute.xlu0 %1437
        %v1439 = vsel %vm725, %v1438, 0
        %1441 = vmatprep.subr.mxu0 0.0
        %1442 = vmatpush1.xpose.msra.mxu0 0.0
        %1443 = vmatprep.subr.mxu0 0.0
        %1444 = vmatpush1.xpose.msra.mxu0 0.0
        %1445 = vmatprep.subr.mxu0 0.0
        %1446 = vmatpush1.xpose.msra.mxu0 0.0
        %1447 = vmatprep.subr.mxu0 0.0
        %1448 = vmatpush1.xpose.msra.mxu0 0.0
        %1449 = vmatprep.subr.mxu0 0.0
        %1450 = vmatpush1.xpose.msra.mxu0 0.0
        %1451 = vmatprep.subr.mxu0 0.0
        %1452 = vmatpush1.xpose.msra.mxu0 0.0
        %1453 = vmatprep.subr.mxu0 0.0
        %1454 = vmatpush1.xpose.msra.mxu0 0.0
        %1455 = vmatprep.subr.mxu0 0.0
        %1456 = vmatpush1.xpose.msra.mxu0 0.0
        %1457 = vmatprep.subr.mxu0 0.0
        %1458 = vmatpush1.xpose.msra.mxu0 0.0
        %1459 = vmatprep.subr.mxu0 0.0
        %1460 = vmatpush1.xpose.msra.mxu0 0.0
        %1461 = vmatprep.subr.mxu0 0.0
        %1462 = vmatpush1.xpose.msra.mxu0 0.0
        %1463 = vmatprep.subr.mxu0 0.0
        %1464 = vmatpush1.xpose.msra.mxu0 0.0
        %1465 = vmatprep.subr.mxu0 0.0
        %1466 = vmatpush1.xpose.msra.mxu0 0.0
        %1467 = vmatprep.subr.mxu0 0.0
        %1468 = vmatpush1.xpose.msra.mxu0 0.0
        %1469 = vmatprep.subr.mxu0 0.0
        %1470 = vmatpush1.xpose.msra.mxu0 0.0
        %1471 = vmatprep.subr.mxu0 0.0
        %1472 = vmatpush1.xpose.msra.mxu0 %v1202
        %1473 = vmatprep.subr.mxu0 0.0
        %1474 = vmatpush2.xpose.msra.mxu0 0.0
        %1475 = vmatprep.subr.mxu0 0.0
        %1476 = vmatpush2.xpose.msra.mxu0 0.0
        %1477 = vmatprep.subr.mxu0 0.0
        %1478 = vmatpush2.xpose.msra.mxu0 0.0
        %1479 = vmatprep.subr.mxu0 0.0
        %1480 = vmatpush2.xpose.msra.mxu0 0.0
        %1481 = vmatprep.subr.mxu0 0.0
        %1482 = vmatpush2.xpose.msra.mxu0 0.0
        %1483 = vmatprep.subr.mxu0 0.0
        %1484 = vmatpush2.xpose.msra.mxu0 0.0
        %1485 = vmatprep.subr.mxu0 0.0
        %1486 = vmatpush2.xpose.msra.mxu0 0.0
        %1487 = vmatprep.subr.mxu0 0.0
        %1488 = vmatpush2.xpose.msra.mxu0 0.0
        %1489 = vmatprep.subr.mxu0 0.0
        %1490 = vmatpush2.xpose.msra.mxu0 0.0
        %1491 = vmatprep.subr.mxu0 0.0
        %1492 = vmatpush2.xpose.msra.mxu0 0.0
        %1493 = vmatprep.subr.mxu0 0.0
        %1494 = vmatpush2.xpose.msra.mxu0 0.0
        %1495 = vmatprep.subr.mxu0 0.0
        %1496 = vmatpush2.xpose.msra.mxu0 0.0
        %1497 = vmatprep.subr.mxu0 0.0
        %1498 = vmatpush2.xpose.msra.mxu0 0.0
        %1499 = vmatprep.subr.mxu0 0.0
        %1500 = vmatpush2.xpose.msra.mxu0 0.0
        %1501 = vmatprep.subr.mxu0 0.0
        %1502 = vmatpush2.xpose.msra.mxu0 0.0
        %1503 = vmatprep.subr.mxu0 0.0
        %1504 = vmatpush2.xpose.msra.mxu0 0.0
        %1505 = vmatprep.mubr.f32.mxu0 0.0
        %1506 = vmatmul.mubr.f32.gmra.mxu0 %v1439
        %v1507 = vpop.f32.mrf.mxu0
        %v1508 = vadd.f32 0.0, %v1507
        %v1509 = vpop.f32.mrf.mxu0
        %1510 = vdwg.mxu0
        %v1511 = vmul.f32 %v1508, 0.35355338
        %v1512 = vsel %vm717, %v1511, -1e+30
        %v1513 = vsel %vm725, %v1512, -inf
        %1514 = vmax.xlane.f32.xlu0 %v1513
        %v1515 = vpop.xlane.xlu0 %1514
        %v1516 = vsub.f32 %v1512, %v1515
        %v1517 = vmul.f32 %v1516, 1.442695
        %v1518 = vpow.pop %v1517
        %v1519 = vsel %vm725, %v1518, 0.0
        %1520 = vadd.xlane.f32.xlu0 %v1519
        %v1521 = vpop.xlane.xlu0 %1520
        %v1522 = vrcp.pop %v1521
        %v1523 = vmul.f32 %v1518, %v1522
        %v1525 = vsel %vm725, %v1523, 0
        %1527 = vmatprep.subr.mxu0 0.0
        %1528 = vmatpush1.msra.mxu0 0.0
        %1529 = vmatprep.subr.mxu0 0.0
        %1530 = vmatpush1.msra.mxu0 0.0
        %1531 = vmatprep.subr.mxu0 0.0
        %1532 = vmatpush1.msra.mxu0 0.0
        %1533 = vmatprep.subr.mxu0 0.0
        %1534 = vmatpush1.msra.mxu0 0.0
        %1535 = vmatprep.subr.mxu0 0.0
        %1536 = vmatpush1.msra.mxu0 0.0
        %1537 = vmatprep.subr.mxu0 0.0
        %1538 = vmatpush1.msra.mxu0 0.0
        %1539 = vmatprep.subr.mxu0 0.0
        %1540 = vmatpush1.msra.mxu0 0.0
        %1541 = vmatprep.subr.mxu0 0.0
        %1542 = vmatpush1.msra.mxu0 0.0
        %1543 = vmatprep.subr.mxu0 0.0
        %1544 = vmatpush1.msra.mxu0 0.0
        %1545 = vmatprep.subr.mxu0 0.0
        %1546 = vmatpush1.msra.mxu0 0.0
        %1547 = vmatprep.subr.mxu0 0.0
        %1548 = vmatpush1.msra.mxu0 0.0
        %1549 = vmatprep.subr.mxu0 0.0
        %1550 = vmatpush1.msra.mxu0 0.0
        %1551 = vmatprep.subr.mxu0 0.0
        %1552 = vmatpush1.msra.mxu0 0.0
        %1553 = vmatprep.subr.mxu0 0.0
        %1554 = vmatpush1.msra.mxu0 0.0
        %1555 = vmatprep.subr.mxu0 0.0
        %1556 = vmatpush1.msra.mxu0 0.0
        %1557 = vmatprep.subr.mxu0 0.0
        %1558 = vmatpush1.msra.mxu0 %v1288
        %1559 = vmatprep.subr.mxu0 0.0
        %1560 = vmatpush2.msra.mxu0 0.0
        %1561 = vmatprep.subr.mxu0 0.0
        %1562 = vmatpush2.msra.mxu0 0.0
        %1563 = vmatprep.subr.mxu0 0.0
        %1564 = vmatpush2.msra.mxu0 0.0
        %1565 = vmatprep.subr.mxu0 0.0
        %1566 = vmatpush2.msra.mxu0 0.0
        %1567 = vmatprep.subr.mxu0 0.0
        %1568 = vmatpush2.msra.mxu0 0.0
        %1569 = vmatprep.subr.mxu0 0.0
        %1570 = vmatpush2.msra.mxu0 0.0
        %1571 = vmatprep.subr.mxu0 0.0
        %1572 = vmatpush2.msra.mxu0 0.0
        %1573 = vmatprep.subr.mxu0 0.0
        %1574 = vmatpush2.msra.mxu0 0.0
        %1575 = vmatprep.subr.mxu0 0.0
        %1576 = vmatpush2.msra.mxu0 0.0
        %1577 = vmatprep.subr.mxu0 0.0
        %1578 = vmatpush2.msra.mxu0 0.0
        %1579 = vmatprep.subr.mxu0 0.0
        %1580 = vmatpush2.msra.mxu0 0.0
        %1581 = vmatprep.subr.mxu0 0.0
        %1582 = vmatpush2.msra.mxu0 0.0
        %1583 = vmatprep.subr.mxu0 0.0
        %1584 = vmatpush2.msra.mxu0 0.0
        %1585 = vmatprep.subr.mxu0 0.0
        %1586 = vmatpush2.msra.mxu0 0.0
        %1587 = vmatprep.subr.mxu0 0.0
        %1588 = vmatpush2.msra.mxu0 0.0
        %1589 = vmatprep.subr.mxu0 0.0
        %1590 = vmatpush2.msra.mxu0 0.0
        %1591 = vmatprep.mubr.f32.mxu0 0.0
        %1592 = vmatmul.mubr.f32.gmra.mxu0 %v1525
        %v1593 = vpop.f32.mrf.mxu0
        %v1594 = vadd.f32 0.0, %v1593
        %v1595 = vpop.f32.mrf.mxu0
        %1596 = vdwg.mxu0
        %v1598 = vsel %vm725, %v1594, 0
        %1600 = vmatprep.subr.mxu0 0.0
        %1601 = vmatpush1.msra.mxu0 0.0
        %1602 = vmatprep.subr.mxu0 0.0
        %1603 = vmatpush1.msra.mxu0 0.0
        %1604 = vmatprep.subr.mxu0 0.0
        %1605 = vmatpush1.msra.mxu0 0.0
        %1606 = vmatprep.subr.mxu0 0.0
        %1607 = vmatpush1.msra.mxu0 0.0
        %1608 = vmatprep.subr.mxu0 0.0
        %1609 = vmatpush1.msra.mxu0 0.0
        %1610 = vmatprep.subr.mxu0 0.0
        %1611 = vmatpush1.msra.mxu0 0.0
        %1612 = vmatprep.subr.mxu0 0.0
        %1613 = vmatpush1.msra.mxu0 0.0
        %1614 = vmatprep.subr.mxu0 0.0
        %1615 = vmatpush1.msra.mxu0 0.0
        %1616 = vmatprep.subr.mxu0 0.0
        %1617 = vmatpush1.msra.mxu0 0.0
        %1618 = vmatprep.subr.mxu0 0.0
        %1619 = vmatpush1.msra.mxu0 0.0
        %1620 = vmatprep.subr.mxu0 0.0
        %1621 = vmatpush1.msra.mxu0 0.0
        %1622 = vmatprep.subr.mxu0 0.0
        %1623 = vmatpush1.msra.mxu0 0.0
        %1624 = vmatprep.subr.mxu0 0.0
        %1625 = vmatpush1.msra.mxu0 0.0
        %1626 = vmatprep.subr.mxu0 0.0
        %1627 = vmatpush1.msra.mxu0 0.0
        %1628 = vmatprep.subr.mxu0 0.0
        %1629 = vmatpush1.msra.mxu0 0.0
        %1630 = vmatprep.subr.mxu0 0.0
        %1631 = vmatpush1.msra.mxu0 %v721
        %1632 = vmatprep.subr.mxu0 0.0
        %1633 = vmatpush2.msra.mxu0 0.0
        %1634 = vmatprep.subr.mxu0 0.0
        %1635 = vmatpush2.msra.mxu0 0.0
        %1636 = vmatprep.subr.mxu0 0.0
        %1637 = vmatpush2.msra.mxu0 0.0
        %1638 = vmatprep.subr.mxu0 0.0
        %1639 = vmatpush2.msra.mxu0 0.0
        %1640 = vmatprep.subr.mxu0 0.0
        %1641 = vmatpush2.msra.mxu0 0.0
        %1642 = vmatprep.subr.mxu0 0.0
        %1643 = vmatpush2.msra.mxu0 0.0
        %1644 = vmatprep.subr.mxu0 0.0
        %1645 = vmatpush2.msra.mxu0 0.0
        %1646 = vmatprep.subr.mxu0 0.0
        %1647 = vmatpush2.msra.mxu0 0.0
        %1648 = vmatprep.subr.mxu0 0.0
        %1649 = vmatpush2.msra.mxu0 0.0
        %1650 = vmatprep.subr.mxu0 0.0
        %1651 = vmatpush2.msra.mxu0 0.0
        %1652 = vmatprep.subr.mxu0 0.0
        %1653 = vmatpush2.msra.mxu0 0.0
        %1654 = vmatprep.subr.mxu0 0.0
        %1655 = vmatpush2.msra.mxu0 0.0
        %1656 = vmatprep.subr.mxu0 0.0
        %1657 = vmatpush2.msra.mxu0 0.0
        %1658 = vmatprep.subr.mxu0 0.0
        %1659 = vmatpush2.msra.mxu0 0.0
        %1660 = vmatprep.subr.mxu0 0.0
        %1661 = vmatpush2.msra.mxu0 0.0
        %1662 = vmatprep.subr.mxu0 0.0
        %1663 = vmatpush2.msra.mxu0 0.0
        %1664 = vmatprep.mubr.f32.mxu0 0.0
        %1665 = vmatmul.mubr.f32.gmra.mxu0 %v1598
        %v1666 = vpop.f32.mrf.mxu0
        %v1667 = vadd.f32 0.0, %v1666
        %v1668 = vpop.f32.mrf.mxu0
        %1669 = vdwg.mxu0
        %v1670 = vadd.f32 %v1436, %v1667
        %v1671 = vadd.f32 %v442, %v1670
        %v1672 = vmul.f32 %v1671, %v1671
        %v1673 = vsel %vm444, %v1672, 0.0
        %1674 = vadd.xlane.f32.xlu0 %v1673
        %v1675 = vpop.xlane.xlu0 %1674
        %v1676 = vmul.f32 %v1675, %v448
        %v1677 = vadd.f32 %v1676, 1e-06
        %v1678 = vrsqrt.pop %v1677
        %v1679 = vmul.f32 %v1671, %v1678
        %v1680 = vld [vmem:[%s8] sm:$0x1]
        %v1682 = vlaneseq
        %v1683 = vshrl.u32 %v1682, 7
        %v1684 = vsub.s32 0, %v1683
        %v1685 = vrot.slane %v1680, %v1684
        %v1687 = vmul.f32 %v1679, %v1685
        %v1688 = vld [vmem:[#allocation8] sm:$0xff]
        %v1689 = vld [vmem:[#allocation8 + $0x8] sm:$0xff]
        %v1690 = vld [vmem:[#allocation8 + $0x10] sm:$0xff]
        %v1691 = vld [vmem:[#allocation8 + $0x18] sm:$0xff]
        %v1693 = vsel %vm444, %v1687, 0
        %1695 = vmatprep.subr.mxu0 0.0
        %1696 = vmatpush1.msra.mxu0 0.0
        %1697 = vmatprep.subr.mxu0 0.0
        %1698 = vmatpush1.msra.mxu0 0.0
        %1699 = vmatprep.subr.mxu0 0.0
        %1700 = vmatpush1.msra.mxu0 0.0
        %1701 = vmatprep.subr.mxu0 0.0
        %1702 = vmatpush1.msra.mxu0 0.0
        %1703 = vmatprep.subr.mxu0 0.0
        %1704 = vmatpush1.msra.mxu0 0.0
        %1705 = vmatprep.subr.mxu0 0.0
        %1706 = vmatpush1.msra.mxu0 0.0
        %1707 = vmatprep.subr.mxu0 0.0
        %1708 = vmatpush1.msra.mxu0 0.0
        %1709 = vmatprep.subr.mxu0 0.0
        %1710 = vmatpush1.msra.mxu0 0.0
        %1711 = vmatprep.subr.mxu0 0.0
        %1712 = vmatpush1.msra.mxu0 0.0
        %1713 = vmatprep.subr.mxu0 0.0
        %1714 = vmatpush1.msra.mxu0 0.0
        %1715 = vmatprep.subr.mxu0 0.0
        %1716 = vmatpush1.msra.mxu0 0.0
        %1717 = vmatprep.subr.mxu0 0.0
        %1718 = vmatpush1.msra.mxu0 0.0
        %1719 = vmatprep.subr.mxu0 0.0
        %1720 = vmatpush1.msra.mxu0 %v1691
        %1721 = vmatprep.subr.mxu0 0.0
        %1722 = vmatpush1.msra.mxu0 %v1690
        %1723 = vmatprep.subr.mxu0 0.0
        %1724 = vmatpush1.msra.mxu0 %v1689
        %1725 = vmatprep.subr.mxu0 0.0
        %1726 = vmatpush1.msra.mxu0 %v1688
        %1727 = vmatprep.subr.mxu0 0.0
        %1728 = vmatpush2.msra.mxu0 0.0
        %1729 = vmatprep.subr.mxu0 0.0
        %1730 = vmatpush2.msra.mxu0 0.0
        %1731 = vmatprep.subr.mxu0 0.0
        %1732 = vmatpush2.msra.mxu0 0.0
        %1733 = vmatprep.subr.mxu0 0.0
        %1734 = vmatpush2.msra.mxu0 0.0
        %1735 = vmatprep.subr.mxu0 0.0
        %1736 = vmatpush2.msra.mxu0 0.0
        %1737 = vmatprep.subr.mxu0 0.0
        %1738 = vmatpush2.msra.mxu0 0.0
        %1739 = vmatprep.subr.mxu0 0.0
        %1740 = vmatpush2.msra.mxu0 0.0
        %1741 = vmatprep.subr.mxu0 0.0
        %1742 = vmatpush2.msra.mxu0 0.0
        %1743 = vmatprep.subr.mxu0 0.0
        %1744 = vmatpush2.msra.mxu0 0.0
        %1745 = vmatprep.subr.mxu0 0.0
        %1746 = vmatpush2.msra.mxu0 0.0
        %1747 = vmatprep.subr.mxu0 0.0
        %1748 = vmatpush2.msra.mxu0 0.0
        %1749 = vmatprep.subr.mxu0 0.0
        %1750 = vmatpush2.msra.mxu0 0.0
        %1751 = vmatprep.subr.mxu0 0.0
        %1752 = vmatpush2.msra.mxu0 0.0
        %1753 = vmatprep.subr.mxu0 0.0
        %1754 = vmatpush2.msra.mxu0 0.0
        %1755 = vmatprep.subr.mxu0 0.0
        %1756 = vmatpush2.msra.mxu0 0.0
        %1757 = vmatprep.subr.mxu0 0.0
        %1758 = vmatpush2.msra.mxu0 0.0
        %1759 = vmatprep.mubr.f32.mxu0 0.0
        %1760 = vmatmul.mubr.f32.gmra.mxu0 %v1693
        %v1761 = vpop.f32.mrf.mxu0
        %v1762 = vadd.f32 0.0, %v1761
        %v1763 = vpop.f32.mrf.mxu0
        %1764 = vdwg.mxu0
        %v1765 = vxor.u32 %v1762, 2147483648
        %v1766 = vmul.f32 %v1765, 1.442695
        %v1767 = vpow.pop %v1766
        %v1768 = vadd.f32 %v1767, 1.0
        %v1769 = vrcp.pop %v1768
        %v1770 = vmul.f32 1.0, %v1769
        %v1771 = vmul.f32 %v1762, %v1770
        %1773 = vrot.lane.b32.xlu0 %v1762, 64
        %v1774 = vpop.permute.xlu0 %1773
        %v1776 = vmul.f32 %v1771, %v1774
        %v1777 = vld [vmem:[%s10] sm:$0xff]
        %v1778 = vld [vmem:[%s10 + $0x8] sm:$0xff]
        %v1779 = vld [vmem:[%s10 + $0x10] sm:$0xff]
        %v1780 = vld [vmem:[%s10 + $0x18] sm:$0xff]
        %v1781 = vld [vmem:[%s10 + $0x20] sm:$0xff]
        %v1782 = vld [vmem:[%s10 + $0x28] sm:$0xff]
        %v1783 = vld [vmem:[%s10 + $0x30] sm:$0xff]
        %v1784 = vld [vmem:[%s10 + $0x38] sm:$0xff]
        %vm1785 = vcmask 523264
        %v1787 = vsel %vm1785, %v1776, 0
        %1789 = vmatprep.subr.mxu0 0.0
        %1790 = vmatpush1.msra.mxu0 0.0
        %1791 = vmatprep.subr.mxu0 0.0
        %1792 = vmatpush1.msra.mxu0 0.0
        %1793 = vmatprep.subr.mxu0 0.0
        %1794 = vmatpush1.msra.mxu0 0.0
        %1795 = vmatprep.subr.mxu0 0.0
        %1796 = vmatpush1.msra.mxu0 0.0
        %1797 = vmatprep.subr.mxu0 0.0
        %1798 = vmatpush1.msra.mxu0 0.0
        %1799 = vmatprep.subr.mxu0 0.0
        %1800 = vmatpush1.msra.mxu0 0.0
        %1801 = vmatprep.subr.mxu0 0.0
        %1802 = vmatpush1.msra.mxu0 0.0
        %1803 = vmatprep.subr.mxu0 0.0
        %1804 = vmatpush1.msra.mxu0 0.0
        %1805 = vmatprep.subr.mxu0 0.0
        %1806 = vmatpush1.msra.mxu0 %v1784
        %1807 = vmatprep.subr.mxu0 0.0
        %1808 = vmatpush1.msra.mxu0 %v1783
        %1809 = vmatprep.subr.mxu0 0.0
        %1810 = vmatpush1.msra.mxu0 %v1782
        %1811 = vmatprep.subr.mxu0 0.0
        %1812 = vmatpush1.msra.mxu0 %v1781
        %1813 = vmatprep.subr.mxu0 0.0
        %1814 = vmatpush1.msra.mxu0 %v1780
        %1815 = vmatprep.subr.mxu0 0.0
        %1816 = vmatpush1.msra.mxu0 %v1779
        %1817 = vmatprep.subr.mxu0 0.0
        %1818 = vmatpush1.msra.mxu0 %v1778
        %1819 = vmatprep.subr.mxu0 0.0
        %1820 = vmatpush1.msra.mxu0 %v1777
        %1821 = vmatprep.subr.mxu0 0.0
        %1822 = vmatpush2.msra.mxu0 0.0
        %1823 = vmatprep.subr.mxu0 0.0
        %1824 = vmatpush2.msra.mxu0 0.0
        %1825 = vmatprep.subr.mxu0 0.0
        %1826 = vmatpush2.msra.mxu0 0.0
        %1827 = vmatprep.subr.mxu0 0.0
        %1828 = vmatpush2.msra.mxu0 0.0
        %1829 = vmatprep.subr.mxu0 0.0
        %1830 = vmatpush2.msra.mxu0 0.0
        %1831 = vmatprep.subr.mxu0 0.0
        %1832 = vmatpush2.msra.mxu0 0.0
        %1833 = vmatprep.subr.mxu0 0.0
        %1834 = vmatpush2.msra.mxu0 0.0
        %1835 = vmatprep.subr.mxu0 0.0
        %1836 = vmatpush2.msra.mxu0 0.0
        %1837 = vmatprep.subr.mxu0 0.0
        %1838 = vmatpush2.msra.mxu0 0.0
        %1839 = vmatprep.subr.mxu0 0.0
        %1840 = vmatpush2.msra.mxu0 0.0
        %1841 = vmatprep.subr.mxu0 0.0
        %1842 = vmatpush2.msra.mxu0 0.0
        %1843 = vmatprep.subr.mxu0 0.0
        %1844 = vmatpush2.msra.mxu0 0.0
        %1845 = vmatprep.subr.mxu0 0.0
        %1846 = vmatpush2.msra.mxu0 0.0
        %1847 = vmatprep.subr.mxu0 0.0
        %1848 = vmatpush2.msra.mxu0 0.0
        %1849 = vmatprep.subr.mxu0 0.0
        %1850 = vmatpush2.msra.mxu0 0.0
        %1851 = vmatprep.subr.mxu0 0.0
        %1852 = vmatpush2.msra.mxu0 0.0
        %1853 = vmatprep.mubr.f32.mxu0 0.0
        %1854 = vmatmul.mubr.f32.gmra.mxu0 %v1787
        %v1855 = vpop.f32.mrf.mxu0
        %v1856 = vadd.f32 0.0, %v1855
        %v1857 = vpop.f32.mrf.mxu0
        %1858 = vdwg.mxu0
        %v1859 = vadd.f32 %v1671, %v1856
        %1860 = vst.msk [vmem:[%s441] sm:$0xff] %vm444, %v1859
        %s1861 = sand.u32 %s274, 1
        %s1862 = scalar_lea.sflag [#allocation4], %s1861
        %s1863 = sand.u32 %s274, 1
        %s1864 = smul.addr %s1863, 8
        %s1865 = scalar_lea.vmem [#allocation10], %s1864
        // Predicated region
        $region81: #{tpu_custom_call.1} parent=63 // pred_check
          %p1866 = pneg %p284
        $region82: #{tpu_custom_call.1} parent=63 // pred_check_branch
          %1868 = sbr.rel (%p1866) target = $region84
        $region83: #{tpu_custom_call.1} parent=63 // pred_region
          %s1870 = ssub.s32 128, 128
          %1871 = vsyncadd %s1862, %s1870
          %s1872 = smul.addr %s30, 128
          %s1873 = scalar_lea.hbm %s11, %s1872
          %s1875 = sshll.u32 %s1865, 4
          %s1876 = int_to_ptr.vmem [resolvable:$true] %s1875
          %1878 = dma.vmem_to_hbm [thread:$0]  %s1876, 128, %s1873, %s1862
        $region84: #{tpu_custom_call.1} parent=63 // pred_fallthru
          _
      $region64: #{tpu_custom_call.1} parent=5 // pred_fallthru
        _
      %p1879 = scmp.le.s32.totalorder 2, %s25
      // Predicated region
      $region85: #{tpu_custom_call.1} parent=5 // pred_check
        %p1880 = pneg %p1879
      $region86: #{tpu_custom_call.1} parent=5 // pred_check_branch
        %1882 = sbr.rel (%p1880) target = $region88
      $region87: #{tpu_custom_call.1} parent=5 // pred_region
        %s1883 = ssub.s32 %s25, 2
        // Predicated region
        $region89: #{tpu_custom_call.1} parent=87 // pred_check
          %p1884 = pneg %p290
        $region90: #{tpu_custom_call.1} parent=87 // pred_check_branch
          %1886 = sbr.rel (%p1884) target = $region92
        $region91: #{tpu_custom_call.1} parent=87 // pred_region
          %s1887 = sand.u32 %s275, 1
          %s1888 = scalar_lea.sflag [#allocation4], %s1887
          %s1889 = sand.u32 %s275, 1
          %s1890 = smul.addr %s1889, 8
          %s1891 = scalar_lea.vmem [#allocation10], %s1890
          %1892 = dma.done %s1888, 128
        $region92: #{tpu_custom_call.1} parent=87 // pred_fallthru
          _
      $region88: #{tpu_custom_call.1} parent=5 // pred_fallthru
        _
    $region6: #{tpu_custom_call.1} parent=1 // loop_footer
      %s29 = sadd.s32 1, %s25
    $region7: #{tpu_custom_call.1} parent=1 // loop_footer_branch
      %24 = sbr.rel target = $region3
    $region8: #{tpu_custom_call.1} parent=1 // loop_exit
      _
    %1893 = vsyncpa [#allocation3], 1
    %s1894 = scalar_lea.sflag [#allocation3], 1
    %1895 = vsyncpa %s1894, 1
    %1896 = vsyncpa [#allocation6], 1
    %1897 = vsyncpa [#allocation9], 1
    %1898 = vsyncpa [#allocation4], 1
    %s1899 = scalar_lea.sflag [#allocation4], 1
    %1900 = vsyncpa %s1899, 1

</llo_original>
